<compile_context>
chip_gen: v5e
topology: v5e:2x2
jax: 0.10.0
libtpu: 0.0.40
codegen_flags: <defaults>
</compile_context>

<pallas_src>
import math
import functools

import jax
import jax.numpy as jnp
from jax import lax
from jax.experimental import pallas as pl
from jax.experimental.pallas import tpu as pltpu


# ----------------------------------------------------------------------------- helpers
def _round_up(a, b):
    return (a + b - 1) // b * b


def _cdiv(a, b):
    return (a + b - 1) // b


def _vmem_capacity_bytes():
    """Per-core VMEM capacity (v5e/v6e: 128 MiB, v7x: 64 MiB)."""
    try:
        return int(pltpu.get_tpu_info().vmem_capacity_bytes)
    except Exception:
        return 64 * 1024 * 1024  # conservative default (v7x per-core)


_BUFFERED_WEIGHTS_SUPPORTED = None


def _probe_buffered_weights():
    """One-time check that pipeline_mode=pl.Buffered(1) is accepted on a
    top-level pallas_call. Only lowers + compiles a tiny kernel; nothing is
    executed, and the result is cached for the process lifetime."""
    global _BUFFERED_WEIGHTS_SUPPORTED
    if _BUFFERED_WEIGHTS_SUPPORTED is not None:
        return _BUFFERED_WEIGHTS_SUPPORTED
    try:
        def _tiny(x_ref, o_ref):
            o_ref[...] = x_ref[...] + 1.0

        call = pl.pallas_call(
            _tiny,
            out_shape=jax.ShapeDtypeStruct((16, 128), jnp.float32),
            grid_spec=pltpu.PrefetchScalarGridSpec(
                num_scalar_prefetch=0,
                grid=(2,),
                in_specs=[pl.BlockSpec((8, 128), lambda i: (0, 0),
                                       pipeline_mode=pl.Buffered(1))],
                out_specs=pl.BlockSpec((8, 128), lambda i: (i, 0)),
            ),
        )
        jax.jit(call).lower(
            jax.ShapeDtypeStruct((8, 128), jnp.float32)).compile()
        _BUFFERED_WEIGHTS_SUPPORTED = True
    except Exception:
        _BUFFERED_WEIGHTS_SUPPORTED = False
    return _BUFFERED_WEIGHTS_SUPPORTED


# ----------------------------------------------------------------------------- kernels
def _gelu(h, approximate):
    if approximate:
        # tanh-approx GELU: routes to the EUP slot (useful on v5e's f32 VALUs).
        c = math.sqrt(2.0 / math.pi)
        return 0.5 * h * (1.0 + jnp.tanh(c * (h + 0.044715 * (h * h * h))))
    # exact erf GELU -- matches torch.nn.GELU() default.
    return 0.5 * h * (1.0 + lax.erf(h * (1.0 / math.sqrt(2.0))))


def _mlp_kernel_resident(x_ref, w1_ref, b1_ref, w2_ref, b2_ref, o_ref, *,
                         approximate_gelu, compute_dtype):
    # x: (tm, Dp)  w1: (Dp, Hp)  b1: (1, Hp)  w2: (Hp, Op)  b2: (1, Op)
    h = jnp.dot(x_ref[...], w1_ref[...], preferred_element_type=jnp.float32)
    h = _gelu(h + b1_ref[...], approximate_gelu)
    # dropout(p=0.0) is the identity in forward -> no-op.
    h = h.astype(compute_dtype)          # feed the MXU in the operand dtype
    out = jnp.dot(h, w2_ref[...], preferred_element_type=jnp.float32)
    o_ref[...] = (out + b2_ref[...]).astype(o_ref.dtype)


def _mlp_kernel_htiled(x_ref, w1_ref, b1_ref, w2_ref, b2_ref, o_ref, acc_ref, *,
                       approximate_gelu, compute_dtype):
    # Hidden dim tiled on grid axis 1 (reduction axis, last). acc is f32 VMEM.
    k = pl.program_id(1)

    @pl.when(k == 0)
    def _():
        acc_ref[...] = jnp.zeros_like(acc_ref)

    h = jnp.dot(x_ref[...], w1_ref[...], preferred_element_type=jnp.float32)
    h = _gelu(h + b1_ref[...], approximate_gelu)
    h = h.astype(compute_dtype)
    acc_ref[...] += jnp.dot(h, w2_ref[...], preferred_element_type=jnp.float32)

    @pl.when(k == pl.num_programs(1) - 1)
    def _():
        o_ref[...] = (acc_ref[...] + b2_ref[...]).astype(o_ref.dtype)


# ----------------------------------------------------------------------------- sizing
def _vmem_bytes_resident(tm, d, h, o, cbytes, obytes, weight_bufs):
    return (2 * tm * d * cbytes                       # x tile, double-buffered
            + 2 * tm * o * obytes                     # out tile, double-buffered
            + weight_bufs * (d * h + h * o) * cbytes  # resident W1/W2
            + weight_bufs * (h + o) * 4               # f32 biases
            + tm * h * (4 + cbytes))                  # fc1 act (f32 + cast copy)


def _vmem_bytes_htiled(tm, th, d, o, cbytes, obytes):
    return (2 * tm * d * cbytes
            + 2 * tm * o * obytes
            + 2 * (d * th + th * o) * cbytes          # W1/W2 tiles, double-buffered
            + 2 * (th + o) * 4                        # f32 bias tiles
            + tm * o * 4                              # f32 accumulator scratch
            + tm * th * (4 + cbytes))                 # fc1 act (f32 + cast copy)


def _largest_fitting_tm(m, tm_max, fits):
    tm = min(_round_up(tm_max, 8), _round_up(m, 8))
    while tm > 8 and not fits(tm):
        tm = _round_up(max(tm // 2, 8), 8)
    return tm


def _balance_tm(m, tm_cap):
    # Pick tm that minimizes last-tile padding for this number of grid steps.
    n = max(_cdiv(m, tm_cap), 1)
    return min(_round_up(_cdiv(m, n), 8), _round_up(tm_cap, 8))


# ----------------------------------------------------------------------------- forward
@functools.partial(
    jax.jit,
    static_argnames=("compute_dtype", "approximate_gelu", "tm_max",
                     "single_buffer_weights", "vmem_capacity",
                     "force_hidden_tiling", "hidden_tile"))
def _mlp_forward_impl(x, w1, b1, w2, b2, *, compute_dtype, approximate_gelu,
                      tm_max, single_buffer_weights, vmem_capacity,
                      force_hidden_tiling, hidden_tile):
    B, N, D = x.shape
    H = w1.shape[1]
    O = w2.shape[1]
    M = B * N

    out_dtype = x.dtype
    cbytes = jnp.dtype(compute_dtype).itemsize
    obytes = jnp.dtype(out_dtype).itemsize

    # Lane-dense / MXU-dense padding (zero padding is numerically exact and a
    # no-op for already-128-aligned dims).
    D_pad = _round_up(D, 128)
    H_pad = _round_up(H, 128)
    O_pad = _round_up(O, 128)

    # Generation-aware VMEM budget/limit.
    budget = int(0.70 * vmem_capacity)
    limit_cap = int(0.80 * vmem_capacity)

    weight_bufs = 1 if single_buffer_weights else 2

    # ---- choose tiling path -------------------------------------------------
    use_h_tiling = bool(force_hidden_tiling)
    tm = th = None
    if not use_h_tiling:
        fits = lambda t: _vmem_bytes_resident(
            t, D_pad, H_pad, O_pad, cbytes, obytes, weight_bufs) <= budget
        tm_cap = _largest_fitting_tm(M, tm_max, fits)
        if (not fits(tm_cap)) or tm_cap < min(128, _round_up(M, 8)):
            # Full weight residency would force a tiny row tile (or not fit at
            # all, e.g. ViT-Base-scale weights on v7x's 64 MiB) -> tile H.
            use_h_tiling = True
        else:
            tm = _balance_tm(M, tm_cap)

    if use_h_tiling:
        # Hidden tile: largest multiple of 128 dividing H_pad (<= 1024), unless
        # the caller pinned one.
        if hidden_tile is not None:
            th = min(_round_up(hidden_tile, 128), H_pad)
        else:
            th = min(H_pad, 1024)
        while H_pad % th:
            th -= 128
        while True:
            fits = lambda t: _vmem_bytes_htiled(
                t, th, D_pad, O_pad, cbytes, obytes) <= budget
            tm_cap = _largest_fitting_tm(M, tm_max, fits)
            if fits(tm_cap) or th == 128:
                break
            th -= 128
            while H_pad % th:
                th -= 128
        tm = _balance_tm(M, tm_cap)

    M_pad = _round_up(M, tm)

    # Explicit scoped-VMEM limit sized from the chosen tiles.
    if use_h_tiling:
        est = _vmem_bytes_htiled(tm, th, D_pad, O_pad, cbytes, obytes)
    else:
        est = _vmem_bytes_resident(tm, D_pad, H_pad, O_pad, cbytes, obytes,
                                   weight_bufs)
    vmem_limit = int(min(max(int(est * 1.5), 32 * 1024 * 1024), limit_cap))

    # ---- layout plumbing (fused into the jitted graph) ----------------------
    # NOTE: compute_dtype=bf16 quantizes x/W1/W2 operands to bf16 for the MXU;
    # accumulation, biases and the output stay f32.
    x2d = x.reshape(M, D).astype(compute_dtype)
    if D_pad != D:
        x2d = jnp.pad(x2d, ((0, 0), (0, D_pad - D)))
    if M_pad != M:
        x2d = jnp.pad(x2d, ((0, M_pad - M), (0, 0)))

    w1c = w1.astype(compute_dtype)
    if D_pad != D or H_pad != H:
        w1c = jnp.pad(w1c, ((0, D_pad - D), (0, H_pad - H)))
    w2c = w2.astype(compute_dtype)
    if H_pad != H or O_pad != O:
        w2c = jnp.pad(w2c, ((0, H_pad - H), (0, O_pad - O)))

    b1p = b1.astype(jnp.float32)
    if H_pad != H:
        b1p = jnp.pad(b1p, (0, H_pad - H))
    b1_2d = b1p.reshape(1, H_pad)
    b2p = b2.astype(jnp.float32)
    if O_pad != O:
        b2p = jnp.pad(b2p, (0, O_pad - O))
    b2_2d = b2p.reshape(1, O_pad)

    # ---- specs / grid --------------------------------------------------------
    if not use_h_tiling:
        def w_spec(shape):
            if single_buffer_weights:
                # grid-invariant operands: one VMEM copy (no double-buffer)
                return pl.BlockSpec(shape, lambda i: (0, 0),
                                    pipeline_mode=pl.Buffered(1))
            return pl.BlockSpec(shape, lambda i: (0, 0))

        in_specs = [
            pl.BlockSpec((tm, D_pad), lambda i: (i, 0)),   # x row tile
            w_spec((D_pad, H_pad)),                        # W1 (resident)
            w_spec((1, H_pad)),                            # b1
            w_spec((H_pad, O_pad)),                        # W2 (resident)
            w_spec((1, O_pad)),                            # b2
        ]
        out_spec = pl.BlockSpec((tm, O_pad), lambda i: (i, 0))
        grid = (M_pad // tm,)
        scratch = []
        dim_sem = ("parallel",)
        kernel = functools.partial(_mlp_kernel_resident,
                                   approximate_gelu=approximate_gelu,
                                   compute_dtype=compute_dtype)
    else:
        in_specs = [
            pl.BlockSpec((tm, D_pad), lambda i, k: (i, 0)),
            pl.BlockSpec((D_pad, th), lambda i, k: (0, k)),
            pl.BlockSpec((1, th), lambda i, k: (0, k)),
            pl.BlockSpec((th, O_pad), lambda i, k: (k, 0)),
            pl.BlockSpec((1, O_pad), lambda i, k: (0, 0)),
        ]
        out_spec = pl.BlockSpec((tm, O_pad), lambda i, k: (i, 0))
        grid = (M_pad // tm, H_pad // th)
        scratch = [pltpu.VMEM((tm, O_pad), jnp.float32)]
        dim_sem = ("parallel", "arbitrary")
        kernel = functools.partial(_mlp_kernel_htiled,
                                   approximate_gelu=approximate_gelu,
                                   compute_dtype=compute_dtype)

    out2d = pl.pallas_call(
        kernel,
        out_shape=jax.ShapeDtypeStruct((M_pad, O_pad), out_dtype),
        grid_spec=pltpu.PrefetchScalarGridSpec(
            num_scalar_prefetch=0,
            grid=grid,
            in_specs=in_specs,
            out_specs=out_spec,
            scratch_shapes=scratch,
        ),
        compiler_params=pltpu.CompilerParams(
            dimension_semantics=dim_sem,
            vmem_limit_bytes=vmem_limit,
        ),
    )(x2d, w1c, b1_2d, w2c, b2_2d)

    return out2d[:M, :O].reshape(B, N, O)


def mlp_forward(x, w1, b1, w2, b2, *, compute_dtype=jnp.bfloat16,
                approximate_gelu=False, tm_max=512,
                force_hidden_tiling=False, hidden_tile=None):
    """Fused MLP forward: y = gelu(x @ W1 + b1) @ W2 + b2 (dropout p=0 -> id).

    x: (B, N, D); W1: (D, H); W2: (H, O) (stored (in, out)).
    compute_dtype: MXU operand dtype (default bf16; accumulation/bias/output
        stay f32). Pass jnp.float32 for bit-exact-ish f32 semantics.
    approximate_gelu: tanh-approx GELU (recommended on v5e); default exact erf
        to match torch.nn.GELU().
    """
    single_buffer = _probe_buffered_weights()   # cached one-time lowering probe
    return _mlp_forward_impl(
        x, w1, b1, w2, b2,
        compute_dtype=compute_dtype,
        approximate_gelu=approximate_gelu,
        tm_max=tm_max,
        single_buffer_weights=single_buffer,
        vmem_capacity=_vmem_capacity_bytes(),
        force_hidden_tiling=force_hidden_tiling,
        hidden_tile=hidden_tile,
    )


# ----------------------------------------------------------------------------- test
def _init_linear(key, fan_in, fan_out):
    """Deterministic init mimicking nn.Linear defaults; stored as (in, out)."""
    kw, kb = jax.random.split(key)
    bound = 1.0 / math.sqrt(fan_in)
    w = jax.random.uniform(kw, (fan_in, fan_out), jnp.float32, -bound, bound)
    b = jax.random.uniform(kb, (fan_out,), jnp.float32, -bound, bound)
    return w, b


def _ref_mlp(x, w1, b1, w2, b2):
    B, N, D = x.shape
    h = x.reshape(-1, D) @ w1 + b1
    h = 0.5 * h * (1.0 + lax.erf(h / math.sqrt(2.0)))
    return (h @ w2 + b2).reshape(B, N, w2.shape[1])


if __name__ == "__main__":
    key = jax.random.PRNGKey(0)
    k_x, k_fc1, k_fc2, k_x2, k_fc3, k_fc4 = jax.random.split(key, 6)

    # ViT-style toy shapes: batch=2, tokens=197 (CLS + 14x14 patches), dim=32.
    # 197 deliberately exercises the row-padding / tile-balancing path.
    B, N, D = 2, 197, 32
    H = 4 * D      # hidden_features = in_features * 4 (module default)
    O = D          # out_features = in_features (module default)

    x = jax.random.normal(k_x, (B, N, D), jnp.float32)
    w1, b1 = _init_linear(k_fc1, D, H)
    w2, b2 = _init_linear(k_fc2, H, O)
    ref = _ref_mlp(x, w1, b1, w2, b2)

    # f32 MXU-operand path: same semantics as the PyTorch module.
    out_f32 = jax.block_until_ready(
        mlp_forward(x, w1, b1, w2, b2, compute_dtype=jnp.float32))
    assert out_f32.shape == (B, N, O)
    assert jnp.allclose(out_f32, ref, atol=1e-4, rtol=1e-4), "f32 mismatch"

    # Default bf16 MXU-operand path (f32 accumulation): small deviations only.
    out_bf16 = jax.block_until_ready(mlp_forward(x, w1, b1, w2, b2))
    assert jnp.allclose(out_bf16, ref, atol=5e-2, rtol=5e-2), "bf16 mismatch"

    # Hidden-dim-tiled (accumulator) path, forced small so the reduction axis
    # actually has >1 step; f32 operands for a tight tolerance.
    B2, N2, D2 = 2, 40, 64
    H2, O2 = 256, 64
    x2 = jax.random.normal(k_x2, (B2, N2, D2), jnp.float32)
    w1b, b1b = _init_linear(k_fc3, D2, H2)
    w2b, b2b = _init_linear(k_fc4, H2, O2)
    ref2 = _ref_mlp(x2, w1b, b1b, w2b, b2b)
    out_ht = jax.block_until_ready(
        mlp_forward(x2, w1b, b1b, w2b, b2b, compute_dtype=jnp.float32,
                    force_hidden_tiling=True, hidden_tile=128))
    assert out_ht.shape == (B2, N2, O2)
    assert jnp.allclose(out_ht, ref2, atol=1e-4, rtol=1e-4), "h-tiled mismatch"

    print("KERNEL_OK")
</pallas_src>

<mosaic_0001>
module attributes {stable_mosaic.version = 11 : i64} {
  func.func @_mlp_kernel_resident(%arg0: i32, %arg1: memref<400x128xf32, #tpu.memory_space<vmem>>, %arg2: memref<128x128xf32, #tpu.memory_space<vmem>>, %arg3: memref<1x128xf32, #tpu.memory_space<vmem>>, %arg4: memref<128x128xf32, #tpu.memory_space<vmem>>, %arg5: memref<1x128xf32, #tpu.memory_space<vmem>>, %arg6: memref<400x128xf32, #tpu.memory_space<vmem>>) attributes {dimension_semantics = [#tpu.dimension_semantics<parallel>], iteration_bounds = array<i64: 1>, scalar_prefetch = 0 : i64, scratch_operands = 0 : i64, tpu.core_type = #tpu.core_type<tc>, window_params = [{transform_indices = @transform_0, window_bounds = array<i64: 400, 128>}, {pipeline_mode = #tpu.pipeline_mode<synchronous>, transform_indices = @transform_1, window_bounds = array<i64: 128, 128>}, {pipeline_mode = #tpu.pipeline_mode<synchronous>, transform_indices = @transform_2, window_bounds = array<i64: 1, 128>}, {pipeline_mode = #tpu.pipeline_mode<synchronous>, transform_indices = @transform_3, window_bounds = array<i64: 128, 128>}, {pipeline_mode = #tpu.pipeline_mode<synchronous>, transform_indices = @transform_4, window_bounds = array<i64: 1, 128>}, {transform_indices = @transform_5, window_bounds = array<i64: 400, 128>}]} {
    %c0 = arith.constant 0 : index
    %c0_0 = arith.constant 0 : index
    %0 = vector.load %arg1[%c0, %c0_0] : memref<400x128xf32, #tpu.memory_space<vmem>>, vector<400x128xf32>
    %c0_1 = arith.constant 0 : index
    %c0_2 = arith.constant 0 : index
    %1 = vector.load %arg2[%c0_1, %c0_2] : memref<128x128xf32, #tpu.memory_space<vmem>>, vector<128x128xf32>
    %cst = arith.constant dense<0.000000e+00> : vector<400x128xf32>
    %2 = tpu.matmul %0, %1, %cst {dimension_numbers = #tpu.dot_dimension_numbers<[1], [0], [0], [1], [0, 0, 1, 1], [], []>} : vector<400x128xf32>, vector<128x128xf32>, vector<400x128xf32> -> vector<400x128xf32>
    %c0_3 = arith.constant 0 : index
    %c0_4 = arith.constant 0 : index
    %3 = vector.load %arg3[%c0_3, %c0_4] : memref<1x128xf32, #tpu.memory_space<vmem>>, vector<1x128xf32>
    %4 = vector.broadcast %3 : vector<1x128xf32> to vector<400x128xf32>
    %5 = arith.addf %2, %4 : vector<400x128xf32>
    %cst_5 = arith.constant 5.000000e-01 : f32
    %6 = vector.broadcast %cst_5 : f32 to vector<400x128xf32>
    %7 = arith.mulf %6, %5 : vector<400x128xf32>
    %cst_6 = arith.constant 0.707106769 : f32
    %8 = vector.broadcast %cst_6 : f32 to vector<400x128xf32>
    %9 = arith.mulf %5, %8 : vector<400x128xf32>
    %10 = math.erf %9 : vector<400x128xf32>
    %cst_7 = arith.constant 1.000000e+00 : f32
    %11 = vector.broadcast %cst_7 : f32 to vector<400x128xf32>
    %12 = arith.addf %11, %10 : vector<400x128xf32>
    %13 = arith.mulf %7, %12 : vector<400x128xf32>
    %c0_8 = arith.constant 0 : index
    %c0_9 = arith.constant 0 : index
    %14 = vector.load %arg4[%c0_8, %c0_9] : memref<128x128xf32, #tpu.memory_space<vmem>>, vector<128x128xf32>
    %cst_10 = arith.constant dense<0.000000e+00> : vector<400x128xf32>
    %15 = tpu.matmul %13, %14, %cst_10 {dimension_numbers = #tpu.dot_dimension_numbers<[1], [0], [0], [1], [0, 0, 1, 1], [], []>} : vector<400x128xf32>, vector<128x128xf32>, vector<400x128xf32> -> vector<400x128xf32>
    %c0_11 = arith.constant 0 : index
    %c0_12 = arith.constant 0 : index
    %16 = vector.load %arg5[%c0_11, %c0_12] : memref<1x128xf32, #tpu.memory_space<vmem>>, vector<1x128xf32>
    %17 = vector.broadcast %16 : vector<1x128xf32> to vector<400x128xf32>
    %18 = arith.addf %15, %17 : vector<400x128xf32>
    %c0_13 = arith.constant 0 : index
    %c0_14 = arith.constant 0 : index
    %19 = vector.load %arg6[%c0_13, %c0_14] : memref<400x128xf32, #tpu.memory_space<vmem>>, vector<400x128xf32>
    tpu.vector_store %arg6[%c0_13, %c0_14], %18 {strides = array<i32>} : memref<400x128xf32, #tpu.memory_space<vmem>>, vector<400x128xf32>,
    return
  }
  func.func @transform_0(%arg0: i32) -> (i32, i32) {
    %c0_i32 = arith.constant 0 : i32
    %c0_i32_0 = arith.constant 0 : i32
    return %arg0, %c0_i32 : i32, i32
  }
  func.func @transform_1(%arg0: i32) -> (i32, i32) {
    %c0_i32 = arith.constant 0 : i32
    %c0_i32_0 = arith.constant 0 : i32
    %c0_i32_1 = arith.constant 0 : i32
    return %c0_i32, %c0_i32_0 : i32, i32
  }
  func.func @transform_2(%arg0: i32) -> (i32, i32) {
    %c0_i32 = arith.constant 0 : i32
    %c0_i32_0 = arith.constant 0 : i32
    %c0_i32_1 = arith.constant 0 : i32
    return %c0_i32, %c0_i32_0 : i32, i32
  }
  func.func @transform_3(%arg0: i32) -> (i32, i32) {
    %c0_i32 = arith.constant 0 : i32
    %c0_i32_0 = arith.constant 0 : i32
    %c0_i32_1 = arith.constant 0 : i32
    return %c0_i32, %c0_i32_0 : i32, i32
  }
  func.func @transform_4(%arg0: i32) -> (i32, i32) {
    %c0_i32 = arith.constant 0 : i32
    %c0_i32_0 = arith.constant 0 : i32
    %c0_i32_1 = arith.constant 0 : i32
    return %c0_i32, %c0_i32_0 : i32, i32
  }
  func.func @transform_5(%arg0: i32) -> (i32, i32) {
    %c0_i32 = arith.constant 0 : i32
    %c0_i32_0 = arith.constant 0 : i32
    return %arg0, %c0_i32 : i32, i32
  }
}

</mosaic_0001>

<llo_original>
// kernel: _mlp_forward_impl.1
$region0: #{_mlp_forward_impl.1}
  #allocation0 [shape = 'u32[]', space=smem, size = 0x4, offset = 0x4, fixed_abs, tag = 'smem constant byte address 0x4 - core index']
  #allocation1 [shape = 'u32[72,128]{1,0:T(1,128)}', space=vmem, size = 0x9000, scoped, tag = 'internal scratch']
  %s0 = inlined_call_operand.vmem [shape: f32[400,128], index: 0, kind: input, shape index: {}]
  %s1 = inlined_call_operand.vmem [shape: f32[128,128], index: 1, kind: input, shape index: {}]
  %s2 = inlined_call_operand.vmem [shape: f32[1,128], index: 2, kind: input, shape index: {}]
  %s3 = inlined_call_operand.vmem [shape: f32[128,128], index: 3, kind: input, shape index: {}]
  %s4 = inlined_call_operand.vmem [shape: f32[1,128], index: 4, kind: input, shape index: {}]
  %s5 = inlined_call_operand.vmem [shape: f32[400,128], index: 5, kind: output, shape index: {}]
  %s6 = sld [smem:[#allocation0]]
  $region30: #{_mlp_forward_impl.1} parent=0
    _
  %s8 = ssub.s32 1, %s6
  %s9 = scalar_select 0, %s8, %s6
  // Predicated region
  $region2: #{_mlp_forward_impl.1} parent=0 // pred_check
    _
  $region3: #{_mlp_forward_impl.1} parent=0 // pred_check_branch
    %11 = sbr.rel (0) target = $region5
  $region4: #{_mlp_forward_impl.1} parent=0 // pred_region
    _
  $region5: #{_mlp_forward_impl.1} parent=0 // pred_fallthru
    _
  // Predicated region
  $region6: #{_mlp_forward_impl.1} parent=0 // pred_check
    _
  $region7: #{_mlp_forward_impl.1} parent=0 // pred_check_branch
    %13 = sbr.rel (0) target = $region9
  $region8: #{_mlp_forward_impl.1} parent=0 // pred_region
    _
  $region9: #{_mlp_forward_impl.1} parent=0 // pred_fallthru
    _
  // Predicated region
  $region10: #{_mlp_forward_impl.1} parent=0 // pred_check
    _
  $region11: #{_mlp_forward_impl.1} parent=0 // pred_check_branch
    %15 = sbr.rel (0) target = $region13
  $region12: #{_mlp_forward_impl.1} parent=0 // pred_region
    _
  $region13: #{_mlp_forward_impl.1} parent=0 // pred_fallthru
    _
  // Predicated region
  $region14: #{_mlp_forward_impl.1} parent=0 // pred_check
    _
  $region15: #{_mlp_forward_impl.1} parent=0 // pred_check_branch
    %17 = sbr.rel (0) target = $region17
  $region16: #{_mlp_forward_impl.1} parent=0 // pred_region
    _
  $region17: #{_mlp_forward_impl.1} parent=0 // pred_fallthru
    _
  // Predicated region
  $region18: #{_mlp_forward_impl.1} parent=0 // pred_check
    _
  $region19: #{_mlp_forward_impl.1} parent=0 // pred_check_branch
    %19 = sbr.rel (0) target = $region21
  $region20: #{_mlp_forward_impl.1} parent=0 // pred_region
    _
  $region21: #{_mlp_forward_impl.1} parent=0 // pred_fallthru
    _
  %v20 = vld [vmem:[%s0] sm:$0xff]
  %v21 = vld [vmem:[%s0 + $0x8] sm:$0xff]
  %v22 = vld [vmem:[%s0 + $0x10] sm:$0xff]
  %v23 = vld [vmem:[%s0 + $0x18] sm:$0xff]
  %v24 = vld [vmem:[%s0 + $0x20] sm:$0xff]
  %v25 = vld [vmem:[%s0 + $0x28] sm:$0xff]
  %v26 = vld [vmem:[%s0 + $0x30] sm:$0xff]
  %v27 = vld [vmem:[%s0 + $0x38] sm:$0xff]
  %v28 = vld [vmem:[%s0 + $0x40] sm:$0xff]
  %v29 = vld [vmem:[%s0 + $0x48] sm:$0xff]
  %v30 = vld [vmem:[%s0 + $0x50] sm:$0xff]
  %v31 = vld [vmem:[%s0 + $0x58] sm:$0xff]
  %v32 = vld [vmem:[%s0 + $0x60] sm:$0xff]
  %v33 = vld [vmem:[%s0 + $0x68] sm:$0xff]
  %v34 = vld [vmem:[%s0 + $0x70] sm:$0xff]
  %v35 = vld [vmem:[%s0 + $0x78] sm:$0xff]
  %v36 = vld [vmem:[%s0 + $0x80] sm:$0xff]
  %v37 = vld [vmem:[%s0 + $0x88] sm:$0xff]
  %v38 = vld [vmem:[%s0 + $0x90] sm:$0xff]
  %v39 = vld [vmem:[%s0 + $0x98] sm:$0xff]
  %v40 = vld [vmem:[%s0 + $0xa0] sm:$0xff]
  %v41 = vld [vmem:[%s0 + $0xa8] sm:$0xff]
  %v42 = vld [vmem:[%s0 + $0xb0] sm:$0xff]
  %v43 = vld [vmem:[%s0 + $0xb8] sm:$0xff]
  %v44 = vld [vmem:[%s0 + $0xc0] sm:$0xff]
  %v45 = vld [vmem:[%s0 + $0xc8] sm:$0xff]
  %v46 = vld [vmem:[%s0 + $0xd0] sm:$0xff]
  %v47 = vld [vmem:[%s0 + $0xd8] sm:$0xff]
  %v48 = vld [vmem:[%s0 + $0xe0] sm:$0xff]
  %v49 = vld [vmem:[%s0 + $0xe8] sm:$0xff]
  %v50 = vld [vmem:[%s0 + $0xf0] sm:$0xff]
  %v51 = vld [vmem:[%s0 + $0xf8] sm:$0xff]
  %v52 = vld [vmem:[%s0 + $0x100] sm:$0xff]
  %v53 = vld [vmem:[%s0 + $0x108] sm:$0xff]
  %v54 = vld [vmem:[%s0 + $0x110] sm:$0xff]
  %v55 = vld [vmem:[%s0 + $0x118] sm:$0xff]
  %v56 = vld [vmem:[%s0 + $0x120] sm:$0xff]
  %v57 = vld [vmem:[%s0 + $0x128] sm:$0xff]
  %v58 = vld [vmem:[%s0 + $0x130] sm:$0xff]
  %v59 = vld [vmem:[%s0 + $0x138] sm:$0xff]
  %v60 = vld [vmem:[%s0 + $0x140] sm:$0xff]
  %v61 = vld [vmem:[%s0 + $0x148] sm:$0xff]
  %v62 = vld [vmem:[%s0 + $0x150] sm:$0xff]
  %v63 = vld [vmem:[%s0 + $0x158] sm:$0xff]
  %v64 = vld [vmem:[%s0 + $0x160] sm:$0xff]
  %v65 = vld [vmem:[%s0 + $0x168] sm:$0xff]
  %v66 = vld [vmem:[%s0 + $0x170] sm:$0xff]
  %v67 = vld [vmem:[%s0 + $0x178] sm:$0xff]
  %v68 = vld [vmem:[%s0 + $0x180] sm:$0xff]
  %v69 = vld [vmem:[%s0 + $0x188] sm:$0xff]
  %v70 = vld [vmem:[%s1] sm:$0xff]
  %v71 = vld [vmem:[%s1 + $0x8] sm:$0xff]
  %v72 = vld [vmem:[%s1 + $0x10] sm:$0xff]
  %v73 = vld [vmem:[%s1 + $0x18] sm:$0xff]
  %v74 = vld [vmem:[%s1 + $0x20] sm:$0xff]
  %v75 = vld [vmem:[%s1 + $0x28] sm:$0xff]
  %v76 = vld [vmem:[%s1 + $0x30] sm:$0xff]
  %v77 = vld [vmem:[%s1 + $0x38] sm:$0xff]
  %v78 = vld [vmem:[%s1 + $0x40] sm:$0xff]
  %v79 = vld [vmem:[%s1 + $0x48] sm:$0xff]
  %v80 = vld [vmem:[%s1 + $0x50] sm:$0xff]
  %v81 = vld [vmem:[%s1 + $0x58] sm:$0xff]
  %v82 = vld [vmem:[%s1 + $0x60] sm:$0xff]
  %v83 = vld [vmem:[%s1 + $0x68] sm:$0xff]
  %v84 = vld [vmem:[%s1 + $0x70] sm:$0xff]
  %v85 = vld [vmem:[%s1 + $0x78] sm:$0xff]
  %v86 = vld [vmem:[%s2] sm:$0x1]
  %v88 = vperm.slane %v86, 0
  %90 = vmatpush.msra.mxu0 %v85
  %91 = vmatpush.msra.mxu0 %v84
  %92 = vmatpush.msra.mxu0 %v83
  %93 = vmatpush.msra.mxu0 %v82
  %94 = vmatpush.msra.mxu0 %v81
  %95 = vmatpush.msra.mxu0 %v80
  %96 = vmatpush.msra.mxu0 %v79
  %97 = vmatpush.msra.mxu0 %v78
  %98 = vmatpush.msra.mxu0 %v77
  %99 = vmatpush.msra.mxu0 %v76
  %100 = vmatpush.msra.mxu0 %v75
  %101 = vmatpush.msra.mxu0 %v74
  %102 = vmatpush.msra.mxu0 %v73
  %103 = vmatpush.msra.mxu0 %v72
  %104 = vmatpush.msra.mxu0 %v71
  %105 = vmatpush.msra.mxu0 %v70
  %106 = vmatmul.f32.gmra.mxu0 %v20
  %v107 = vpop.f32.mrf.mxu0
  %v108 = vadd.f32 %v88, %v107
  %109 = vmatmul.f32.gmra.mxu0 %v21
  %v110 = vpop.f32.mrf.mxu0
  %v111 = vadd.f32 %v88, %v110
  %112 = vmatmul.f32.gmra.mxu0 %v22
  %v113 = vpop.f32.mrf.mxu0
  %v114 = vadd.f32 %v88, %v113
  %115 = vmatmul.f32.gmra.mxu0 %v23
  %v116 = vpop.f32.mrf.mxu0
  %v117 = vadd.f32 %v88, %v116
  %118 = vmatmul.f32.gmra.mxu0 %v24
  %v119 = vpop.f32.mrf.mxu0
  %v120 = vadd.f32 %v88, %v119
  %121 = vmatmul.f32.gmra.mxu0 %v25
  %v122 = vpop.f32.mrf.mxu0
  %v123 = vadd.f32 %v88, %v122
  %124 = vmatmul.f32.gmra.mxu0 %v26
  %v125 = vpop.f32.mrf.mxu0
  %v126 = vadd.f32 %v88, %v125
  %127 = vmatmul.f32.gmra.mxu0 %v27
  %v128 = vpop.f32.mrf.mxu0
  %v129 = vadd.f32 %v88, %v128
  %130 = vmatmul.f32.gmra.mxu0 %v28
  %v131 = vpop.f32.mrf.mxu0
  %v132 = vadd.f32 %v88, %v131
  %133 = vmatmul.f32.gmra.mxu0 %v29
  %v134 = vpop.f32.mrf.mxu0
  %v135 = vadd.f32 %v88, %v134
  %136 = vmatmul.f32.gmra.mxu0 %v30
  %v137 = vpop.f32.mrf.mxu0
  %v138 = vadd.f32 %v88, %v137
  %139 = vmatmul.f32.gmra.mxu0 %v31
  %v140 = vpop.f32.mrf.mxu0
  %v141 = vadd.f32 %v88, %v140
  %142 = vmatmul.f32.gmra.mxu0 %v32
  %v143 = vpop.f32.mrf.mxu0
  %v144 = vadd.f32 %v88, %v143
  %145 = vmatmul.f32.gmra.mxu0 %v33
  %v146 = vpop.f32.mrf.mxu0
  %v147 = vadd.f32 %v88, %v146
  %148 = vmatmul.f32.gmra.mxu0 %v34
  %v149 = vpop.f32.mrf.mxu0
  %v150 = vadd.f32 %v88, %v149
  %151 = vmatmul.f32.gmra.mxu0 %v35
  %v152 = vpop.f32.mrf.mxu0
  %v153 = vadd.f32 %v88, %v152
  %154 = vmatmul.f32.gmra.mxu0 %v36
  %v155 = vpop.f32.mrf.mxu0
  %v156 = vadd.f32 %v88, %v155
  %157 = vmatmul.f32.gmra.mxu0 %v37
  %v158 = vpop.f32.mrf.mxu0
  %v159 = vadd.f32 %v88, %v158
  %160 = vmatmul.f32.gmra.mxu0 %v38
  %v161 = vpop.f32.mrf.mxu0
  %v162 = vadd.f32 %v88, %v161
  %163 = vmatmul.f32.gmra.mxu0 %v39
  %v164 = vpop.f32.mrf.mxu0
  %v165 = vadd.f32 %v88, %v164
  %166 = vmatmul.f32.gmra.mxu0 %v40
  %v167 = vpop.f32.mrf.mxu0
  %v168 = vadd.f32 %v88, %v167
  %169 = vmatmul.f32.gmra.mxu0 %v41
  %v170 = vpop.f32.mrf.mxu0
  %v171 = vadd.f32 %v88, %v170
  %172 = vmatmul.f32.gmra.mxu0 %v42
  %v173 = vpop.f32.mrf.mxu0
  %v174 = vadd.f32 %v88, %v173
  %175 = vmatmul.f32.gmra.mxu0 %v43
  %v176 = vpop.f32.mrf.mxu0
  %v177 = vadd.f32 %v88, %v176
  %178 = vmatmul.f32.gmra.mxu0 %v44
  %v179 = vpop.f32.mrf.mxu0
  %v180 = vadd.f32 %v88, %v179
  %181 = vmatmul.f32.gmra.mxu0 %v45
  %v182 = vpop.f32.mrf.mxu0
  %v183 = vadd.f32 %v88, %v182
  %184 = vmatmul.f32.gmra.mxu0 %v46
  %v185 = vpop.f32.mrf.mxu0
  %v186 = vadd.f32 %v88, %v185
  %187 = vmatmul.f32.gmra.mxu0 %v47
  %v188 = vpop.f32.mrf.mxu0
  %v189 = vadd.f32 %v88, %v188
  %190 = vmatmul.f32.gmra.mxu0 %v48
  %v191 = vpop.f32.mrf.mxu0
  %v192 = vadd.f32 %v88, %v191
  %193 = vmatmul.f32.gmra.mxu0 %v49
  %v194 = vpop.f32.mrf.mxu0
  %v195 = vadd.f32 %v88, %v194
  %196 = vmatmul.f32.gmra.mxu0 %v50
  %v197 = vpop.f32.mrf.mxu0
  %v198 = vadd.f32 %v88, %v197
  %199 = vmatmul.f32.gmra.mxu0 %v51
  %v200 = vpop.f32.mrf.mxu0
  %v201 = vadd.f32 %v88, %v200
  %202 = vmatmul.f32.gmra.mxu0 %v52
  %v203 = vpop.f32.mrf.mxu0
  %v204 = vadd.f32 %v88, %v203
  %205 = vmatmul.f32.gmra.mxu0 %v53
  %v206 = vpop.f32.mrf.mxu0
  %v207 = vadd.f32 %v88, %v206
  %208 = vmatmul.f32.gmra.mxu0 %v54
  %v209 = vpop.f32.mrf.mxu0
  %v210 = vadd.f32 %v88, %v209
  %211 = vmatmul.f32.gmra.mxu0 %v55
  %v212 = vpop.f32.mrf.mxu0
  %v213 = vadd.f32 %v88, %v212
  %214 = vmatmul.f32.gmra.mxu0 %v56
  %v215 = vpop.f32.mrf.mxu0
  %v216 = vadd.f32 %v88, %v215
  %217 = vmatmul.f32.gmra.mxu0 %v57
  %v218 = vpop.f32.mrf.mxu0
  %v219 = vadd.f32 %v88, %v218
  %220 = vmatmul.f32.gmra.mxu0 %v58
  %v221 = vpop.f32.mrf.mxu0
  %v222 = vadd.f32 %v88, %v221
  %223 = vmatmul.f32.gmra.mxu0 %v59
  %v224 = vpop.f32.mrf.mxu0
  %v225 = vadd.f32 %v88, %v224
  %226 = vmatmul.f32.gmra.mxu0 %v60
  %v227 = vpop.f32.mrf.mxu0
  %v228 = vadd.f32 %v88, %v227
  %229 = vmatmul.f32.gmra.mxu0 %v61
  %v230 = vpop.f32.mrf.mxu0
  %v231 = vadd.f32 %v88, %v230
  %232 = vmatmul.f32.gmra.mxu0 %v62
  %v233 = vpop.f32.mrf.mxu0
  %v234 = vadd.f32 %v88, %v233
  %235 = vmatmul.f32.gmra.mxu0 %v63
  %v236 = vpop.f32.mrf.mxu0
  %v237 = vadd.f32 %v88, %v236
  %238 = vmatmul.f32.gmra.mxu0 %v64
  %v239 = vpop.f32.mrf.mxu0
  %v240 = vadd.f32 %v88, %v239
  %241 = vmatmul.f32.gmra.mxu0 %v65
  %v242 = vpop.f32.mrf.mxu0
  %v243 = vadd.f32 %v88, %v242
  %244 = vmatmul.f32.gmra.mxu0 %v66
  %v245 = vpop.f32.mrf.mxu0
  %v246 = vadd.f32 %v88, %v245
  %247 = vmatmul.f32.gmra.mxu0 %v67
  %v248 = vpop.f32.mrf.mxu0
  %v249 = vadd.f32 %v88, %v248
  %250 = vmatmul.f32.gmra.mxu0 %v68
  %v251 = vpop.f32.mrf.mxu0
  %v252 = vadd.f32 %v88, %v251
  %253 = vmatmul.f32.gmra.mxu0 %v69
  %v254 = vpop.f32.mrf.mxu0
  %v255 = vadd.f32 %v88, %v254
  %256 = vdwg.mxu0
  %v257 = vmul.f32 %v108, 0.5
  %v258 = vmul.f32 %v111, 0.5
  %v259 = vmul.f32 %v114, 0.5
  %v260 = vmul.f32 %v117, 0.5
  %v261 = vmul.f32 %v120, 0.5
  %v262 = vmul.f32 %v123, 0.5
  %v263 = vmul.f32 %v126, 0.5
  %v264 = vmul.f32 %v129, 0.5
  %v265 = vmul.f32 %v132, 0.5
  %v266 = vmul.f32 %v135, 0.5
  %v267 = vmul.f32 %v138, 0.5
  %v268 = vmul.f32 %v141, 0.5
  %v269 = vmul.f32 %v144, 0.5
  %v270 = vmul.f32 %v147, 0.5
  %v271 = vmul.f32 %v150, 0.5
  %v272 = vmul.f32 %v153, 0.5
  %v273 = vmul.f32 %v156, 0.5
  %v274 = vmul.f32 %v159, 0.5
  %v275 = vmul.f32 %v162, 0.5
  %v276 = vmul.f32 %v165, 0.5
  %v277 = vmul.f32 %v168, 0.5
  %v278 = vmul.f32 %v171, 0.5
  %v279 = vmul.f32 %v174, 0.5
  %v280 = vmul.f32 %v177, 0.5
  %v281 = vmul.f32 %v180, 0.5
  %v282 = vmul.f32 %v183, 0.5
  %v283 = vmul.f32 %v186, 0.5
  %v284 = vmul.f32 %v189, 0.5
  %v285 = vmul.f32 %v192, 0.5
  %v286 = vmul.f32 %v195, 0.5
  %v287 = vmul.f32 %v198, 0.5
  %v288 = vmul.f32 %v201, 0.5
  %v289 = vmul.f32 %v204, 0.5
  %v290 = vmul.f32 %v207, 0.5
  %v291 = vmul.f32 %v210, 0.5
  %v292 = vmul.f32 %v213, 0.5
  %v293 = vmul.f32 %v216, 0.5
  %v294 = vmul.f32 %v219, 0.5
  %v295 = vmul.f32 %v222, 0.5
  %v296 = vmul.f32 %v225, 0.5
  %v297 = vmul.f32 %v228, 0.5
  %v298 = vmul.f32 %v231, 0.5
  %v299 = vmul.f32 %v234, 0.5
  %v300 = vmul.f32 %v237, 0.5
  %v301 = vmul.f32 %v240, 0.5
  %v302 = vmul.f32 %v243, 0.5
  %v303 = vmul.f32 %v246, 0.5
  %v304 = vmul.f32 %v249, 0.5
  %v305 = vmul.f32 %v252, 0.5
  %v306 = vmul.f32 %v255, 0.5
  %v307 = vmul.f32 %v108, 0.70710677
  %v308 = vmul.f32 %v111, 0.70710677
  %v309 = vmul.f32 %v114, 0.70710677
  %v310 = vmul.f32 %v117, 0.70710677
  %v311 = vmul.f32 %v120, 0.70710677
  %v312 = vmul.f32 %v123, 0.70710677
  %v313 = vmul.f32 %v126, 0.70710677
  %v314 = vmul.f32 %v129, 0.70710677
  %v315 = vmul.f32 %v132, 0.70710677
  %v316 = vmul.f32 %v135, 0.70710677
  %v317 = vmul.f32 %v138, 0.70710677
  %v318 = vmul.f32 %v141, 0.70710677
  %v319 = vmul.f32 %v144, 0.70710677
  %v320 = vmul.f32 %v147, 0.70710677
  %v321 = vmul.f32 %v150, 0.70710677
  %v322 = vmul.f32 %v153, 0.70710677
  %v323 = vmul.f32 %v156, 0.70710677
  %v324 = vmul.f32 %v159, 0.70710677
  %v325 = vmul.f32 %v162, 0.70710677
  %v326 = vmul.f32 %v165, 0.70710677
  %v327 = vmul.f32 %v168, 0.70710677
  %v328 = vmul.f32 %v171, 0.70710677
  %v329 = vmul.f32 %v174, 0.70710677
  %v330 = vmul.f32 %v177, 0.70710677
  %v331 = vmul.f32 %v180, 0.70710677
  %v332 = vmul.f32 %v183, 0.70710677
  %v333 = vmul.f32 %v186, 0.70710677
  %v334 = vmul.f32 %v189, 0.70710677
  %v335 = vmul.f32 %v192, 0.70710677
  %v336 = vmul.f32 %v195, 0.70710677
  %v337 = vmul.f32 %v198, 0.70710677
  %v338 = vmul.f32 %v201, 0.70710677
  %v339 = vmul.f32 %v204, 0.70710677
  %v340 = vmul.f32 %v207, 0.70710677
  %v341 = vmul.f32 %v210, 0.70710677
  %v342 = vmul.f32 %v213, 0.70710677
  %v343 = vmul.f32 %v216, 0.70710677
  %v344 = vmul.f32 %v219, 0.70710677
  %v345 = vmul.f32 %v222, 0.70710677
  %v346 = vmul.f32 %v225, 0.70710677
  %v347 = vmul.f32 %v228, 0.70710677
  %v348 = vmul.f32 %v231, 0.70710677
  %v349 = vmul.f32 %v234, 0.70710677
  %v350 = vmul.f32 %v237, 0.70710677
  %v351 = vmul.f32 %v240, 0.70710677
  %v352 = vmul.f32 %v243, 0.70710677
  %v353 = vmul.f32 %v246, 0.70710677
  %v354 = vmul.f32 %v249, 0.70710677
  %v355 = vmul.f32 %v252, 0.70710677
  %v356 = vmul.f32 %v255, 0.70710677
  %v357 = vmul.f32 %v307, %v307
  %v358 = vmin.f32 16.0, %v357
  %v359 = vmul.f32 %v358, 2.1237322e-06
  %v360 = vadd.f32 %v359, 0.00028619796
  %v361 = vmul.f32 %v358, %v360
  %v362 = vadd.f32 %v361, 0.0036580483
  %v363 = vmul.f32 %v358, %v362
  %v364 = vadd.f32 %v363, 0.05243302
  %v365 = vmul.f32 %v358, %v364
  %v366 = vadd.f32 %v365, 0.18741608
  %v367 = vmul.f32 %v358, %v366
  %v368 = vadd.f32 %v367, 1.1283791
  %v369 = vmul.f32 %v307, %v368
  %v370 = vmul.f32 %v358, 3.8918573e-05
  %v371 = vadd.f32 %v370, 0.001143296
  %v372 = vmul.f32 %v358, %v371
  %v373 = vadd.f32 %v372, 0.014752088
  %v374 = vmul.f32 %v358, %v373
  %v375 = vadd.f32 %v374, 0.112945676
  %v376 = vmul.f32 %v358, %v375
  %v377 = vadd.f32 %v376, 0.4994258
  %v378 = vmul.f32 %v358, %v377
  %v379 = vadd.f32 %v378, 1.0
  %v380 = vrcp.pop %v379
  %v381 = vmul.f32 %v379, %v380
  %v382 = vsub.f32 1.0, %v381
  %v383 = vmul.f32 %v380, %v382
  %v384 = vadd.f32 %v380, %v383
  %vm385 = vweird.f32 %v379
  %vm386 = vweird.f32 %v380
  %vm387 = vmor %vm385, %vm386
  %v388 = vsel %vm387, %v380, %v384
  %v389 = vand.u32 2147483647, %v379
  %vm390 = vcmp.eq.f32.partialorder %v389, 8.507059e+37
  %v391 = vand.u32 %v379, 2147483648
  %v392 = vor.u32 1.1754944e-38, %v391
  %v393 = vsel %vm390, %v392, %v388
  %v394 = vmul.f32 %v369, %v393
  %v395 = vmin.f32 %v394, 1.0
  %v396 = vmax.f32 %v395, -1.0
  %v397 = vmul.f32 %v308, %v308
  %v398 = vmin.f32 16.0, %v397
  %v399 = vmul.f32 %v398, 2.1237322e-06
  %v400 = vadd.f32 %v399, 0.00028619796
  %v401 = vmul.f32 %v398, %v400
  %v402 = vadd.f32 %v401, 0.0036580483
  %v403 = vmul.f32 %v398, %v402
  %v404 = vadd.f32 %v403, 0.05243302
  %v405 = vmul.f32 %v398, %v404
  %v406 = vadd.f32 %v405, 0.18741608
  %v407 = vmul.f32 %v398, %v406
  %v408 = vadd.f32 %v407, 1.1283791
  %v409 = vmul.f32 %v308, %v408
  %v410 = vmul.f32 %v398, 3.8918573e-05
  %v411 = vadd.f32 %v410, 0.001143296
  %v412 = vmul.f32 %v398, %v411
  %v413 = vadd.f32 %v412, 0.014752088
  %v414 = vmul.f32 %v398, %v413
  %v415 = vadd.f32 %v414, 0.112945676
  %v416 = vmul.f32 %v398, %v415
  %v417 = vadd.f32 %v416, 0.4994258
  %v418 = vmul.f32 %v398, %v417
  %v419 = vadd.f32 %v418, 1.0
  %v420 = vrcp.pop %v419
  %v421 = vmul.f32 %v419, %v420
  %v422 = vsub.f32 1.0, %v421
  %v423 = vmul.f32 %v420, %v422
  %v424 = vadd.f32 %v420, %v423
  %vm425 = vweird.f32 %v419
  %vm426 = vweird.f32 %v420
  %vm427 = vmor %vm425, %vm426
  %v428 = vsel %vm427, %v420, %v424
  %v429 = vand.u32 2147483647, %v419
  %vm430 = vcmp.eq.f32.partialorder %v429, 8.507059e+37
  %v431 = vand.u32 %v419, 2147483648
  %v432 = vor.u32 1.1754944e-38, %v431
  %v433 = vsel %vm430, %v432, %v428
  %v434 = vmul.f32 %v409, %v433
  %v435 = vmin.f32 %v434, 1.0
  %v436 = vmax.f32 %v435, -1.0
  %v437 = vmul.f32 %v309, %v309
  %v438 = vmin.f32 16.0, %v437
  %v439 = vmul.f32 %v438, 2.1237322e-06
  %v440 = vadd.f32 %v439, 0.00028619796
  %v441 = vmul.f32 %v438, %v440
  %v442 = vadd.f32 %v441, 0.0036580483
  %v443 = vmul.f32 %v438, %v442
  %v444 = vadd.f32 %v443, 0.05243302
  %v445 = vmul.f32 %v438, %v444
  %v446 = vadd.f32 %v445, 0.18741608
  %v447 = vmul.f32 %v438, %v446
  %v448 = vadd.f32 %v447, 1.1283791
  %v449 = vmul.f32 %v309, %v448
  %v450 = vmul.f32 %v438, 3.8918573e-05
  %v451 = vadd.f32 %v450, 0.001143296
  %v452 = vmul.f32 %v438, %v451
  %v453 = vadd.f32 %v452, 0.014752088
  %v454 = vmul.f32 %v438, %v453
  %v455 = vadd.f32 %v454, 0.112945676
  %v456 = vmul.f32 %v438, %v455
  %v457 = vadd.f32 %v456, 0.4994258
  %v458 = vmul.f32 %v438, %v457
  %v459 = vadd.f32 %v458, 1.0
  %v460 = vrcp.pop %v459
  %v461 = vmul.f32 %v459, %v460
  %v462 = vsub.f32 1.0, %v461
  %v463 = vmul.f32 %v460, %v462
  %v464 = vadd.f32 %v460, %v463
  %vm465 = vweird.f32 %v459
  %vm466 = vweird.f32 %v460
  %vm467 = vmor %vm465, %vm466
  %v468 = vsel %vm467, %v460, %v464
  %v469 = vand.u32 2147483647, %v459
  %vm470 = vcmp.eq.f32.partialorder %v469, 8.507059e+37
  %v471 = vand.u32 %v459, 2147483648
  %v472 = vor.u32 1.1754944e-38, %v471
  %v473 = vsel %vm470, %v472, %v468
  %v474 = vmul.f32 %v449, %v473
  %v475 = vmin.f32 %v474, 1.0
  %v476 = vmax.f32 %v475, -1.0
  %v477 = vmul.f32 %v310, %v310
  %v478 = vmin.f32 16.0, %v477
  %v479 = vmul.f32 %v478, 2.1237322e-06
  %v480 = vadd.f32 %v479, 0.00028619796
  %v481 = vmul.f32 %v478, %v480
  %v482 = vadd.f32 %v481, 0.0036580483
  %v483 = vmul.f32 %v478, %v482
  %v484 = vadd.f32 %v483, 0.05243302
  %v485 = vmul.f32 %v478, %v484
  %v486 = vadd.f32 %v485, 0.18741608
  %v487 = vmul.f32 %v478, %v486
  %v488 = vadd.f32 %v487, 1.1283791
  %v489 = vmul.f32 %v310, %v488
  %v490 = vmul.f32 %v478, 3.8918573e-05
  %v491 = vadd.f32 %v490, 0.001143296
  %v492 = vmul.f32 %v478, %v491
  %v493 = vadd.f32 %v492, 0.014752088
  %v494 = vmul.f32 %v478, %v493
  %v495 = vadd.f32 %v494, 0.112945676
  %v496 = vmul.f32 %v478, %v495
  %v497 = vadd.f32 %v496, 0.4994258
  %v498 = vmul.f32 %v478, %v497
  %v499 = vadd.f32 %v498, 1.0
  %v500 = vrcp.pop %v499
  %v501 = vmul.f32 %v499, %v500
  %v502 = vsub.f32 1.0, %v501
  %v503 = vmul.f32 %v500, %v502
  %v504 = vadd.f32 %v500, %v503
  %vm505 = vweird.f32 %v499
  %vm506 = vweird.f32 %v500
  %vm507 = vmor %vm505, %vm506
  %v508 = vsel %vm507, %v500, %v504
  %v509 = vand.u32 2147483647, %v499
  %vm510 = vcmp.eq.f32.partialorder %v509, 8.507059e+37
  %v511 = vand.u32 %v499, 2147483648
  %v512 = vor.u32 1.1754944e-38, %v511
  %v513 = vsel %vm510, %v512, %v508
  %v514 = vmul.f32 %v489, %v513
  %v515 = vmin.f32 %v514, 1.0
  %v516 = vmax.f32 %v515, -1.0
  %v517 = vmul.f32 %v311, %v311
  %v518 = vmin.f32 16.0, %v517
  %v519 = vmul.f32 %v518, 2.1237322e-06
  %v520 = vadd.f32 %v519, 0.00028619796
  %v521 = vmul.f32 %v518, %v520
  %v522 = vadd.f32 %v521, 0.0036580483
  %v523 = vmul.f32 %v518, %v522
  %v524 = vadd.f32 %v523, 0.05243302
  %v525 = vmul.f32 %v518, %v524
  %v526 = vadd.f32 %v525, 0.18741608
  %v527 = vmul.f32 %v518, %v526
  %v528 = vadd.f32 %v527, 1.1283791
  %v529 = vmul.f32 %v311, %v528
  %v530 = vmul.f32 %v518, 3.8918573e-05
  %v531 = vadd.f32 %v530, 0.001143296
  %v532 = vmul.f32 %v518, %v531
  %v533 = vadd.f32 %v532, 0.014752088
  %v534 = vmul.f32 %v518, %v533
  %v535 = vadd.f32 %v534, 0.112945676
  %v536 = vmul.f32 %v518, %v535
  %v537 = vadd.f32 %v536, 0.4994258
  %v538 = vmul.f32 %v518, %v537
  %v539 = vadd.f32 %v538, 1.0
  %v540 = vrcp.pop %v539
  %v541 = vmul.f32 %v539, %v540
  %v542 = vsub.f32 1.0, %v541
  %v543 = vmul.f32 %v540, %v542
  %v544 = vadd.f32 %v540, %v543
  %vm545 = vweird.f32 %v539
  %vm546 = vweird.f32 %v540
  %vm547 = vmor %vm545, %vm546
  %v548 = vsel %vm547, %v540, %v544
  %v549 = vand.u32 2147483647, %v539
  %vm550 = vcmp.eq.f32.partialorder %v549, 8.507059e+37
  %v551 = vand.u32 %v539, 2147483648
  %v552 = vor.u32 1.1754944e-38, %v551
  %v553 = vsel %vm550, %v552, %v548
  %v554 = vmul.f32 %v529, %v553
  %v555 = vmin.f32 %v554, 1.0
  %v556 = vmax.f32 %v555, -1.0
  %v557 = vmul.f32 %v312, %v312
  %v558 = vmin.f32 16.0, %v557
  %v559 = vmul.f32 %v558, 2.1237322e-06
  %v560 = vadd.f32 %v559, 0.00028619796
  %v561 = vmul.f32 %v558, %v560
  %v562 = vadd.f32 %v561, 0.0036580483
  %v563 = vmul.f32 %v558, %v562
  %v564 = vadd.f32 %v563, 0.05243302
  %v565 = vmul.f32 %v558, %v564
  %v566 = vadd.f32 %v565, 0.18741608
  %v567 = vmul.f32 %v558, %v566
  %v568 = vadd.f32 %v567, 1.1283791
  %v569 = vmul.f32 %v312, %v568
  %v570 = vmul.f32 %v558, 3.8918573e-05
  %v571 = vadd.f32 %v570, 0.001143296
  %v572 = vmul.f32 %v558, %v571
  %v573 = vadd.f32 %v572, 0.014752088
  %v574 = vmul.f32 %v558, %v573
  %v575 = vadd.f32 %v574, 0.112945676
  %v576 = vmul.f32 %v558, %v575
  %v577 = vadd.f32 %v576, 0.4994258
  %v578 = vmul.f32 %v558, %v577
  %v579 = vadd.f32 %v578, 1.0
  %v580 = vrcp.pop %v579
  %v581 = vmul.f32 %v579, %v580
  %v582 = vsub.f32 1.0, %v581
  %v583 = vmul.f32 %v580, %v582
  %v584 = vadd.f32 %v580, %v583
  %vm585 = vweird.f32 %v579
  %vm586 = vweird.f32 %v580
  %vm587 = vmor %vm585, %vm586
  %v588 = vsel %vm587, %v580, %v584
  %v589 = vand.u32 2147483647, %v579
  %vm590 = vcmp.eq.f32.partialorder %v589, 8.507059e+37
  %v591 = vand.u32 %v579, 2147483648
  %v592 = vor.u32 1.1754944e-38, %v591
  %v593 = vsel %vm590, %v592, %v588
  %v594 = vmul.f32 %v569, %v593
  %v595 = vmin.f32 %v594, 1.0
  %v596 = vmax.f32 %v595, -1.0
  %v597 = vmul.f32 %v313, %v313
  %v598 = vmin.f32 16.0, %v597
  %v599 = vmul.f32 %v598, 2.1237322e-06
  %v600 = vadd.f32 %v599, 0.00028619796
  %v601 = vmul.f32 %v598, %v600
  %v602 = vadd.f32 %v601, 0.0036580483
  %v603 = vmul.f32 %v598, %v602
  %v604 = vadd.f32 %v603, 0.05243302
  %v605 = vmul.f32 %v598, %v604
  %v606 = vadd.f32 %v605, 0.18741608
  %v607 = vmul.f32 %v598, %v606
  %v608 = vadd.f32 %v607, 1.1283791
  %v609 = vmul.f32 %v313, %v608
  %v610 = vmul.f32 %v598, 3.8918573e-05
  %v611 = vadd.f32 %v610, 0.001143296
  %v612 = vmul.f32 %v598, %v611
  %v613 = vadd.f32 %v612, 0.014752088
  %v614 = vmul.f32 %v598, %v613
  %v615 = vadd.f32 %v614, 0.112945676
  %v616 = vmul.f32 %v598, %v615
  %v617 = vadd.f32 %v616, 0.4994258
  %v618 = vmul.f32 %v598, %v617
  %v619 = vadd.f32 %v618, 1.0
  %v620 = vrcp.pop %v619
  %v621 = vmul.f32 %v619, %v620
  %v622 = vsub.f32 1.0, %v621
  %v623 = vmul.f32 %v620, %v622
  %v624 = vadd.f32 %v620, %v623
  %vm625 = vweird.f32 %v619
  %vm626 = vweird.f32 %v620
  %vm627 = vmor %vm625, %vm626
  %v628 = vsel %vm627, %v620, %v624
  %v629 = vand.u32 2147483647, %v619
  %vm630 = vcmp.eq.f32.partialorder %v629, 8.507059e+37
  %v631 = vand.u32 %v619, 2147483648
  %v632 = vor.u32 1.1754944e-38, %v631
  %v633 = vsel %vm630, %v632, %v628
  %v634 = vmul.f32 %v609, %v633
  %v635 = vmin.f32 %v634, 1.0
  %v636 = vmax.f32 %v635, -1.0
  %v637 = vmul.f32 %v314, %v314
  %v638 = vmin.f32 16.0, %v637
  %v639 = vmul.f32 %v638, 2.1237322e-06
  %v640 = vadd.f32 %v639, 0.00028619796
  %v641 = vmul.f32 %v638, %v640
  %v642 = vadd.f32 %v641, 0.0036580483
  %v643 = vmul.f32 %v638, %v642
  %v644 = vadd.f32 %v643, 0.05243302
  %v645 = vmul.f32 %v638, %v644
  %v646 = vadd.f32 %v645, 0.18741608
  %v647 = vmul.f32 %v638, %v646
  %v648 = vadd.f32 %v647, 1.1283791
  %v649 = vmul.f32 %v314, %v648
  %v650 = vmul.f32 %v638, 3.8918573e-05
  %v651 = vadd.f32 %v650, 0.001143296
  %v652 = vmul.f32 %v638, %v651
  %v653 = vadd.f32 %v652, 0.014752088
  %v654 = vmul.f32 %v638, %v653
  %v655 = vadd.f32 %v654, 0.112945676
  %v656 = vmul.f32 %v638, %v655
  %v657 = vadd.f32 %v656, 0.4994258
  %v658 = vmul.f32 %v638, %v657
  %v659 = vadd.f32 %v658, 1.0
  %v660 = vrcp.pop %v659
  %v661 = vmul.f32 %v659, %v660
  %v662 = vsub.f32 1.0, %v661
  %v663 = vmul.f32 %v660, %v662
  %v664 = vadd.f32 %v660, %v663
  %vm665 = vweird.f32 %v659
  %vm666 = vweird.f32 %v660
  %vm667 = vmor %vm665, %vm666
  %v668 = vsel %vm667, %v660, %v664
  %v669 = vand.u32 2147483647, %v659
  %vm670 = vcmp.eq.f32.partialorder %v669, 8.507059e+37
  %v671 = vand.u32 %v659, 2147483648
  %v672 = vor.u32 1.1754944e-38, %v671
  %v673 = vsel %vm670, %v672, %v668
  %v674 = vmul.f32 %v649, %v673
  %v675 = vmin.f32 %v674, 1.0
  %v676 = vmax.f32 %v675, -1.0
  %v677 = vmul.f32 %v315, %v315
  %v678 = vmin.f32 16.0, %v677
  %v679 = vmul.f32 %v678, 2.1237322e-06
  %v680 = vadd.f32 %v679, 0.00028619796
  %v681 = vmul.f32 %v678, %v680
  %v682 = vadd.f32 %v681, 0.0036580483
  %v683 = vmul.f32 %v678, %v682
  %v684 = vadd.f32 %v683, 0.05243302
  %v685 = vmul.f32 %v678, %v684
  %v686 = vadd.f32 %v685, 0.18741608
  %v687 = vmul.f32 %v678, %v686
  %v688 = vadd.f32 %v687, 1.1283791
  %v689 = vmul.f32 %v315, %v688
  %v690 = vmul.f32 %v678, 3.8918573e-05
  %v691 = vadd.f32 %v690, 0.001143296
  %v692 = vmul.f32 %v678, %v691
  %v693 = vadd.f32 %v692, 0.014752088
  %v694 = vmul.f32 %v678, %v693
  %v695 = vadd.f32 %v694, 0.112945676
  %v696 = vmul.f32 %v678, %v695
  %v697 = vadd.f32 %v696, 0.4994258
  %v698 = vmul.f32 %v678, %v697
  %v699 = vadd.f32 %v698, 1.0
  %v700 = vrcp.pop %v699
  %v701 = vmul.f32 %v699, %v700
  %v702 = vsub.f32 1.0, %v701
  %v703 = vmul.f32 %v700, %v702
  %v704 = vadd.f32 %v700, %v703
  %vm705 = vweird.f32 %v699
  %vm706 = vweird.f32 %v700
  %vm707 = vmor %vm705, %vm706
  %v708 = vsel %vm707, %v700, %v704
  %v709 = vand.u32 2147483647, %v699
  %vm710 = vcmp.eq.f32.partialorder %v709, 8.507059e+37
  %v711 = vand.u32 %v699, 2147483648
  %v712 = vor.u32 1.1754944e-38, %v711
  %v713 = vsel %vm710, %v712, %v708
  %v714 = vmul.f32 %v689, %v713
  %v715 = vmin.f32 %v714, 1.0
  %v716 = vmax.f32 %v715, -1.0
  %v717 = vmul.f32 %v316, %v316
  %v718 = vmin.f32 16.0, %v717
  %v719 = vmul.f32 %v718, 2.1237322e-06
  %v720 = vadd.f32 %v719, 0.00028619796
  %v721 = vmul.f32 %v718, %v720
  %v722 = vadd.f32 %v721, 0.0036580483
  %v723 = vmul.f32 %v718, %v722
  %v724 = vadd.f32 %v723, 0.05243302
  %v725 = vmul.f32 %v718, %v724
  %v726 = vadd.f32 %v725, 0.18741608
  %v727 = vmul.f32 %v718, %v726
  %v728 = vadd.f32 %v727, 1.1283791
  %v729 = vmul.f32 %v316, %v728
  %v730 = vmul.f32 %v718, 3.8918573e-05
  %v731 = vadd.f32 %v730, 0.001143296
  %v732 = vmul.f32 %v718, %v731
  %v733 = vadd.f32 %v732, 0.014752088
  %v734 = vmul.f32 %v718, %v733
  %v735 = vadd.f32 %v734, 0.112945676
  %v736 = vmul.f32 %v718, %v735
  %v737 = vadd.f32 %v736, 0.4994258
  %v738 = vmul.f32 %v718, %v737
  %v739 = vadd.f32 %v738, 1.0
  %v740 = vrcp.pop %v739
  %v741 = vmul.f32 %v739, %v740
  %v742 = vsub.f32 1.0, %v741
  %v743 = vmul.f32 %v740, %v742
  %v744 = vadd.f32 %v740, %v743
  %vm745 = vweird.f32 %v739
  %vm746 = vweird.f32 %v740
  %vm747 = vmor %vm745, %vm746
  %v748 = vsel %vm747, %v740, %v744
  %v749 = vand.u32 2147483647, %v739
  %vm750 = vcmp.eq.f32.partialorder %v749, 8.507059e+37
  %v751 = vand.u32 %v739, 2147483648
  %v752 = vor.u32 1.1754944e-38, %v751
  %v753 = vsel %vm750, %v752, %v748
  %v754 = vmul.f32 %v729, %v753
  %v755 = vmin.f32 %v754, 1.0
  %v756 = vmax.f32 %v755, -1.0
  %v757 = vmul.f32 %v317, %v317
  %v758 = vmin.f32 16.0, %v757
  %v759 = vmul.f32 %v758, 2.1237322e-06
  %v760 = vadd.f32 %v759, 0.00028619796
  %v761 = vmul.f32 %v758, %v760
  %v762 = vadd.f32 %v761, 0.0036580483
  %v763 = vmul.f32 %v758, %v762
  %v764 = vadd.f32 %v763, 0.05243302
  %v765 = vmul.f32 %v758, %v764
  %v766 = vadd.f32 %v765, 0.18741608
  %v767 = vmul.f32 %v758, %v766
  %v768 = vadd.f32 %v767, 1.1283791
  %v769 = vmul.f32 %v317, %v768
  %v770 = vmul.f32 %v758, 3.8918573e-05
  %v771 = vadd.f32 %v770, 0.001143296
  %v772 = vmul.f32 %v758, %v771
  %v773 = vadd.f32 %v772, 0.014752088
  %v774 = vmul.f32 %v758, %v773
  %v775 = vadd.f32 %v774, 0.112945676
  %v776 = vmul.f32 %v758, %v775
  %v777 = vadd.f32 %v776, 0.4994258
  %v778 = vmul.f32 %v758, %v777
  %v779 = vadd.f32 %v778, 1.0
  %v780 = vrcp.pop %v779
  %v781 = vmul.f32 %v779, %v780
  %v782 = vsub.f32 1.0, %v781
  %v783 = vmul.f32 %v780, %v782
  %v784 = vadd.f32 %v780, %v783
  %vm785 = vweird.f32 %v779
  %vm786 = vweird.f32 %v780
  %vm787 = vmor %vm785, %vm786
  %v788 = vsel %vm787, %v780, %v784
  %v789 = vand.u32 2147483647, %v779
  %vm790 = vcmp.eq.f32.partialorder %v789, 8.507059e+37
  %v791 = vand.u32 %v779, 2147483648
  %v792 = vor.u32 1.1754944e-38, %v791
  %v793 = vsel %vm790, %v792, %v788
  %v794 = vmul.f32 %v769, %v793
  %v795 = vmin.f32 %v794, 1.0
  %v796 = vmax.f32 %v795, -1.0
  %v797 = vmul.f32 %v318, %v318
  %v798 = vmin.f32 16.0, %v797
  %v799 = vmul.f32 %v798, 2.1237322e-06
  %v800 = vadd.f32 %v799, 0.00028619796
  %v801 = vmul.f32 %v798, %v800
  %v802 = vadd.f32 %v801, 0.0036580483
  %v803 = vmul.f32 %v798, %v802
  %v804 = vadd.f32 %v803, 0.05243302
  %v805 = vmul.f32 %v798, %v804
  %v806 = vadd.f32 %v805, 0.18741608
  %v807 = vmul.f32 %v798, %v806
  %v808 = vadd.f32 %v807, 1.1283791
  %v809 = vmul.f32 %v318, %v808
  %v810 = vmul.f32 %v798, 3.8918573e-05
  %v811 = vadd.f32 %v810, 0.001143296
  %v812 = vmul.f32 %v798, %v811
  %v813 = vadd.f32 %v812, 0.014752088
  %v814 = vmul.f32 %v798, %v813
  %v815 = vadd.f32 %v814, 0.112945676
  %v816 = vmul.f32 %v798, %v815
  %v817 = vadd.f32 %v816, 0.4994258
  %v818 = vmul.f32 %v798, %v817
  %v819 = vadd.f32 %v818, 1.0
  %v820 = vrcp.pop %v819
  %v821 = vmul.f32 %v819, %v820
  %v822 = vsub.f32 1.0, %v821
  %v823 = vmul.f32 %v820, %v822
  %v824 = vadd.f32 %v820, %v823
  %vm825 = vweird.f32 %v819
  %vm826 = vweird.f32 %v820
  %vm827 = vmor %vm825, %vm826
  %v828 = vsel %vm827, %v820, %v824
  %v829 = vand.u32 2147483647, %v819
  %vm830 = vcmp.eq.f32.partialorder %v829, 8.507059e+37
  %v831 = vand.u32 %v819, 2147483648
  %v832 = vor.u32 1.1754944e-38, %v831
  %v833 = vsel %vm830, %v832, %v828
  %v834 = vmul.f32 %v809, %v833
  %v835 = vmin.f32 %v834, 1.0
  %v836 = vmax.f32 %v835, -1.0
  %v837 = vmul.f32 %v319, %v319
  %v838 = vmin.f32 16.0, %v837
  %v839 = vmul.f32 %v838, 2.1237322e-06
  %v840 = vadd.f32 %v839, 0.00028619796
  %v841 = vmul.f32 %v838, %v840
  %v842 = vadd.f32 %v841, 0.0036580483
  %v843 = vmul.f32 %v838, %v842
  %v844 = vadd.f32 %v843, 0.05243302
  %v845 = vmul.f32 %v838, %v844
  %v846 = vadd.f32 %v845, 0.18741608
  %v847 = vmul.f32 %v838, %v846
  %v848 = vadd.f32 %v847, 1.1283791
  %v849 = vmul.f32 %v319, %v848
  %v850 = vmul.f32 %v838, 3.8918573e-05
  %v851 = vadd.f32 %v850, 0.001143296
  %v852 = vmul.f32 %v838, %v851
  %v853 = vadd.f32 %v852, 0.014752088
  %v854 = vmul.f32 %v838, %v853
  %v855 = vadd.f32 %v854, 0.112945676
  %v856 = vmul.f32 %v838, %v855
  %v857 = vadd.f32 %v856, 0.4994258
  %v858 = vmul.f32 %v838, %v857
  %v859 = vadd.f32 %v858, 1.0
  %v860 = vrcp.pop %v859
  %v861 = vmul.f32 %v859, %v860
  %v862 = vsub.f32 1.0, %v861
  %v863 = vmul.f32 %v860, %v862
  %v864 = vadd.f32 %v860, %v863
  %vm865 = vweird.f32 %v859
  %vm866 = vweird.f32 %v860
  %vm867 = vmor %vm865, %vm866
  %v868 = vsel %vm867, %v860, %v864
  %v869 = vand.u32 2147483647, %v859
  %vm870 = vcmp.eq.f32.partialorder %v869, 8.507059e+37
  %v871 = vand.u32 %v859, 2147483648
  %v872 = vor.u32 1.1754944e-38, %v871
  %v873 = vsel %vm870, %v872, %v868
  %v874 = vmul.f32 %v849, %v873
  %v875 = vmin.f32 %v874, 1.0
  %v876 = vmax.f32 %v875, -1.0
  %v877 = vmul.f32 %v320, %v320
  %v878 = vmin.f32 16.0, %v877
  %v879 = vmul.f32 %v878, 2.1237322e-06
  %v880 = vadd.f32 %v879, 0.00028619796
  %v881 = vmul.f32 %v878, %v880
  %v882 = vadd.f32 %v881, 0.0036580483
  %v883 = vmul.f32 %v878, %v882
  %v884 = vadd.f32 %v883, 0.05243302
  %v885 = vmul.f32 %v878, %v884
  %v886 = vadd.f32 %v885, 0.18741608
  %v887 = vmul.f32 %v878, %v886
  %v888 = vadd.f32 %v887, 1.1283791
  %v889 = vmul.f32 %v320, %v888
  %v890 = vmul.f32 %v878, 3.8918573e-05
  %v891 = vadd.f32 %v890, 0.001143296
  %v892 = vmul.f32 %v878, %v891
  %v893 = vadd.f32 %v892, 0.014752088
  %v894 = vmul.f32 %v878, %v893
  %v895 = vadd.f32 %v894, 0.112945676
  %v896 = vmul.f32 %v878, %v895
  %v897 = vadd.f32 %v896, 0.4994258
  %v898 = vmul.f32 %v878, %v897
  %v899 = vadd.f32 %v898, 1.0
  %v900 = vrcp.pop %v899
  %v901 = vmul.f32 %v899, %v900
  %v902 = vsub.f32 1.0, %v901
  %v903 = vmul.f32 %v900, %v902
  %v904 = vadd.f32 %v900, %v903
  %vm905 = vweird.f32 %v899
  %vm906 = vweird.f32 %v900
  %vm907 = vmor %vm905, %vm906
  %v908 = vsel %vm907, %v900, %v904
  %v909 = vand.u32 2147483647, %v899
  %vm910 = vcmp.eq.f32.partialorder %v909, 8.507059e+37
  %v911 = vand.u32 %v899, 2147483648
  %v912 = vor.u32 1.1754944e-38, %v911
  %v913 = vsel %vm910, %v912, %v908
  %v914 = vmul.f32 %v889, %v913
  %v915 = vmin.f32 %v914, 1.0
  %v916 = vmax.f32 %v915, -1.0
  %v917 = vmul.f32 %v321, %v321
  %v918 = vmin.f32 16.0, %v917
  %v919 = vmul.f32 %v918, 2.1237322e-06
  %v920 = vadd.f32 %v919, 0.00028619796
  %v921 = vmul.f32 %v918, %v920
  %v922 = vadd.f32 %v921, 0.0036580483
  %v923 = vmul.f32 %v918, %v922
  %v924 = vadd.f32 %v923, 0.05243302
  %v925 = vmul.f32 %v918, %v924
  %v926 = vadd.f32 %v925, 0.18741608
  %v927 = vmul.f32 %v918, %v926
  %v928 = vadd.f32 %v927, 1.1283791
  %v929 = vmul.f32 %v321, %v928
  %v930 = vmul.f32 %v918, 3.8918573e-05
  %v931 = vadd.f32 %v930, 0.001143296
  %v932 = vmul.f32 %v918, %v931
  %v933 = vadd.f32 %v932, 0.014752088
  %v934 = vmul.f32 %v918, %v933
  %v935 = vadd.f32 %v934, 0.112945676
  %v936 = vmul.f32 %v918, %v935
  %v937 = vadd.f32 %v936, 0.4994258
  %v938 = vmul.f32 %v918, %v937
  %v939 = vadd.f32 %v938, 1.0
  %v940 = vrcp.pop %v939
  %v941 = vmul.f32 %v939, %v940
  %v942 = vsub.f32 1.0, %v941
  %v943 = vmul.f32 %v940, %v942
  %v944 = vadd.f32 %v940, %v943
  %vm945 = vweird.f32 %v939
  %vm946 = vweird.f32 %v940
  %vm947 = vmor %vm945, %vm946
  %v948 = vsel %vm947, %v940, %v944
  %v949 = vand.u32 2147483647, %v939
  %vm950 = vcmp.eq.f32.partialorder %v949, 8.507059e+37
  %v951 = vand.u32 %v939, 2147483648
  %v952 = vor.u32 1.1754944e-38, %v951
  %v953 = vsel %vm950, %v952, %v948
  %v954 = vmul.f32 %v929, %v953
  %v955 = vmin.f32 %v954, 1.0
  %v956 = vmax.f32 %v955, -1.0
  %v957 = vmul.f32 %v322, %v322
  %v958 = vmin.f32 16.0, %v957
  %v959 = vmul.f32 %v958, 2.1237322e-06
  %v960 = vadd.f32 %v959, 0.00028619796
  %v961 = vmul.f32 %v958, %v960
  %v962 = vadd.f32 %v961, 0.0036580483
  %v963 = vmul.f32 %v958, %v962
  %v964 = vadd.f32 %v963, 0.05243302
  %v965 = vmul.f32 %v958, %v964
  %v966 = vadd.f32 %v965, 0.18741608
  %v967 = vmul.f32 %v958, %v966
  %v968 = vadd.f32 %v967, 1.1283791
  %v969 = vmul.f32 %v322, %v968
  %v970 = vmul.f32 %v958, 3.8918573e-05
  %v971 = vadd.f32 %v970, 0.001143296
  %v972 = vmul.f32 %v958, %v971
  %v973 = vadd.f32 %v972, 0.014752088
  %v974 = vmul.f32 %v958, %v973
  %v975 = vadd.f32 %v974, 0.112945676
  %v976 = vmul.f32 %v958, %v975
  %v977 = vadd.f32 %v976, 0.4994258
  %v978 = vmul.f32 %v958, %v977
  %v979 = vadd.f32 %v978, 1.0
  %v980 = vrcp.pop %v979
  %v981 = vmul.f32 %v979, %v980
  %v982 = vsub.f32 1.0, %v981
  %v983 = vmul.f32 %v980, %v982
  %v984 = vadd.f32 %v980, %v983
  %vm985 = vweird.f32 %v979
  %vm986 = vweird.f32 %v980
  %vm987 = vmor %vm985, %vm986
  %v988 = vsel %vm987, %v980, %v984
  %v989 = vand.u32 2147483647, %v979
  %vm990 = vcmp.eq.f32.partialorder %v989, 8.507059e+37
  %v991 = vand.u32 %v979, 2147483648
  %v992 = vor.u32 1.1754944e-38, %v991
  %v993 = vsel %vm990, %v992, %v988
  %v994 = vmul.f32 %v969, %v993
  %v995 = vmin.f32 %v994, 1.0
  %v996 = vmax.f32 %v995, -1.0
  %v997 = vmul.f32 %v323, %v323
  %v998 = vmin.f32 16.0, %v997
  %v999 = vmul.f32 %v998, 2.1237322e-06
  %v1000 = vadd.f32 %v999, 0.00028619796
  %v1001 = vmul.f32 %v998, %v1000
  %v1002 = vadd.f32 %v1001, 0.0036580483
  %v1003 = vmul.f32 %v998, %v1002
  %v1004 = vadd.f32 %v1003, 0.05243302
  %v1005 = vmul.f32 %v998, %v1004
  %v1006 = vadd.f32 %v1005, 0.18741608
  %v1007 = vmul.f32 %v998, %v1006
  %v1008 = vadd.f32 %v1007, 1.1283791
  %v1009 = vmul.f32 %v323, %v1008
  %v1010 = vmul.f32 %v998, 3.8918573e-05
  %v1011 = vadd.f32 %v1010, 0.001143296
  %v1012 = vmul.f32 %v998, %v1011
  %v1013 = vadd.f32 %v1012, 0.014752088
  %v1014 = vmul.f32 %v998, %v1013
  %v1015 = vadd.f32 %v1014, 0.112945676
  %v1016 = vmul.f32 %v998, %v1015
  %v1017 = vadd.f32 %v1016, 0.4994258
  %v1018 = vmul.f32 %v998, %v1017
  %v1019 = vadd.f32 %v1018, 1.0
  %v1020 = vrcp.pop %v1019
  %v1021 = vmul.f32 %v1019, %v1020
  %v1022 = vsub.f32 1.0, %v1021
  %v1023 = vmul.f32 %v1020, %v1022
  %v1024 = vadd.f32 %v1020, %v1023
  %vm1025 = vweird.f32 %v1019
  %vm1026 = vweird.f32 %v1020
  %vm1027 = vmor %vm1025, %vm1026
  %v1028 = vsel %vm1027, %v1020, %v1024
  %v1029 = vand.u32 2147483647, %v1019
  %vm1030 = vcmp.eq.f32.partialorder %v1029, 8.507059e+37
  %v1031 = vand.u32 %v1019, 2147483648
  %v1032 = vor.u32 1.1754944e-38, %v1031
  %v1033 = vsel %vm1030, %v1032, %v1028
  %v1034 = vmul.f32 %v1009, %v1033
  %v1035 = vmin.f32 %v1034, 1.0
  %v1036 = vmax.f32 %v1035, -1.0
  %v1037 = vmul.f32 %v324, %v324
  %v1038 = vmin.f32 16.0, %v1037
  %v1039 = vmul.f32 %v1038, 2.1237322e-06
  %v1040 = vadd.f32 %v1039, 0.00028619796
  %v1041 = vmul.f32 %v1038, %v1040
  %v1042 = vadd.f32 %v1041, 0.0036580483
  %v1043 = vmul.f32 %v1038, %v1042
  %v1044 = vadd.f32 %v1043, 0.05243302
  %v1045 = vmul.f32 %v1038, %v1044
  %v1046 = vadd.f32 %v1045, 0.18741608
  %v1047 = vmul.f32 %v1038, %v1046
  %v1048 = vadd.f32 %v1047, 1.1283791
  %v1049 = vmul.f32 %v324, %v1048
  %v1050 = vmul.f32 %v1038, 3.8918573e-05
  %v1051 = vadd.f32 %v1050, 0.001143296
  %v1052 = vmul.f32 %v1038, %v1051
  %v1053 = vadd.f32 %v1052, 0.014752088
  %v1054 = vmul.f32 %v1038, %v1053
  %v1055 = vadd.f32 %v1054, 0.112945676
  %v1056 = vmul.f32 %v1038, %v1055
  %v1057 = vadd.f32 %v1056, 0.4994258
  %v1058 = vmul.f32 %v1038, %v1057
  %v1059 = vadd.f32 %v1058, 1.0
  %v1060 = vrcp.pop %v1059
  %v1061 = vmul.f32 %v1059, %v1060
  %v1062 = vsub.f32 1.0, %v1061
  %v1063 = vmul.f32 %v1060, %v1062
  %v1064 = vadd.f32 %v1060, %v1063
  %vm1065 = vweird.f32 %v1059
  %vm1066 = vweird.f32 %v1060
  %vm1067 = vmor %vm1065, %vm1066
  %v1068 = vsel %vm1067, %v1060, %v1064
  %v1069 = vand.u32 2147483647, %v1059
  %vm1070 = vcmp.eq.f32.partialorder %v1069, 8.507059e+37
  %v1071 = vand.u32 %v1059, 2147483648
  %v1072 = vor.u32 1.1754944e-38, %v1071
  %v1073 = vsel %vm1070, %v1072, %v1068
  %v1074 = vmul.f32 %v1049, %v1073
  %v1075 = vmin.f32 %v1074, 1.0
  %v1076 = vmax.f32 %v1075, -1.0
  %v1077 = vmul.f32 %v325, %v325
  %v1078 = vmin.f32 16.0, %v1077
  %v1079 = vmul.f32 %v1078, 2.1237322e-06
  %v1080 = vadd.f32 %v1079, 0.00028619796
  %v1081 = vmul.f32 %v1078, %v1080
  %v1082 = vadd.f32 %v1081, 0.0036580483
  %v1083 = vmul.f32 %v1078, %v1082
  %v1084 = vadd.f32 %v1083, 0.05243302
  %v1085 = vmul.f32 %v1078, %v1084
  %v1086 = vadd.f32 %v1085, 0.18741608
  %v1087 = vmul.f32 %v1078, %v1086
  %v1088 = vadd.f32 %v1087, 1.1283791
  %v1089 = vmul.f32 %v325, %v1088
  %v1090 = vmul.f32 %v1078, 3.8918573e-05
  %v1091 = vadd.f32 %v1090, 0.001143296
  %v1092 = vmul.f32 %v1078, %v1091
  %v1093 = vadd.f32 %v1092, 0.014752088
  %v1094 = vmul.f32 %v1078, %v1093
  %v1095 = vadd.f32 %v1094, 0.112945676
  %v1096 = vmul.f32 %v1078, %v1095
  %v1097 = vadd.f32 %v1096, 0.4994258
  %v1098 = vmul.f32 %v1078, %v1097
  %v1099 = vadd.f32 %v1098, 1.0
  %v1100 = vrcp.pop %v1099
  %v1101 = vmul.f32 %v1099, %v1100
  %v1102 = vsub.f32 1.0, %v1101
  %v1103 = vmul.f32 %v1100, %v1102
  %v1104 = vadd.f32 %v1100, %v1103
  %vm1105 = vweird.f32 %v1099
  %vm1106 = vweird.f32 %v1100
  %vm1107 = vmor %vm1105, %vm1106
  %v1108 = vsel %vm1107, %v1100, %v1104
  %v1109 = vand.u32 2147483647, %v1099
  %vm1110 = vcmp.eq.f32.partialorder %v1109, 8.507059e+37
  %v1111 = vand.u32 %v1099, 2147483648
  %v1112 = vor.u32 1.1754944e-38, %v1111
  %v1113 = vsel %vm1110, %v1112, %v1108
  %v1114 = vmul.f32 %v1089, %v1113
  %v1115 = vmin.f32 %v1114, 1.0
  %v1116 = vmax.f32 %v1115, -1.0
  %v1117 = vmul.f32 %v326, %v326
  %v1118 = vmin.f32 16.0, %v1117
  %v1119 = vmul.f32 %v1118, 2.1237322e-06
  %v1120 = vadd.f32 %v1119, 0.00028619796
  %v1121 = vmul.f32 %v1118, %v1120
  %v1122 = vadd.f32 %v1121, 0.0036580483
  %v1123 = vmul.f32 %v1118, %v1122
  %v1124 = vadd.f32 %v1123, 0.05243302
  %v1125 = vmul.f32 %v1118, %v1124
  %v1126 = vadd.f32 %v1125, 0.18741608
  %v1127 = vmul.f32 %v1118, %v1126
  %v1128 = vadd.f32 %v1127, 1.1283791
  %v1129 = vmul.f32 %v326, %v1128
  %v1130 = vmul.f32 %v1118, 3.8918573e-05
  %v1131 = vadd.f32 %v1130, 0.001143296
  %v1132 = vmul.f32 %v1118, %v1131
  %v1133 = vadd.f32 %v1132, 0.014752088
  %v1134 = vmul.f32 %v1118, %v1133
  %v1135 = vadd.f32 %v1134, 0.112945676
  %v1136 = vmul.f32 %v1118, %v1135
  %v1137 = vadd.f32 %v1136, 0.4994258
  %v1138 = vmul.f32 %v1118, %v1137
  %v1139 = vadd.f32 %v1138, 1.0
  %v1140 = vrcp.pop %v1139
  %v1141 = vmul.f32 %v1139, %v1140
  %v1142 = vsub.f32 1.0, %v1141
  %v1143 = vmul.f32 %v1140, %v1142
  %v1144 = vadd.f32 %v1140, %v1143
  %vm1145 = vweird.f32 %v1139
  %vm1146 = vweird.f32 %v1140
  %vm1147 = vmor %vm1145, %vm1146
  %v1148 = vsel %vm1147, %v1140, %v1144
  %v1149 = vand.u32 2147483647, %v1139
  %vm1150 = vcmp.eq.f32.partialorder %v1149, 8.507059e+37
  %v1151 = vand.u32 %v1139, 2147483648
  %v1152 = vor.u32 1.1754944e-38, %v1151
  %v1153 = vsel %vm1150, %v1152, %v1148
  %v1154 = vmul.f32 %v1129, %v1153
  %v1155 = vmin.f32 %v1154, 1.0
  %v1156 = vmax.f32 %v1155, -1.0
  %v1157 = vmul.f32 %v327, %v327
  %v1158 = vmin.f32 16.0, %v1157
  %v1159 = vmul.f32 %v1158, 2.1237322e-06
  %v1160 = vadd.f32 %v1159, 0.00028619796
  %v1161 = vmul.f32 %v1158, %v1160
  %v1162 = vadd.f32 %v1161, 0.0036580483
  %v1163 = vmul.f32 %v1158, %v1162
  %v1164 = vadd.f32 %v1163, 0.05243302
  %v1165 = vmul.f32 %v1158, %v1164
  %v1166 = vadd.f32 %v1165, 0.18741608
  %v1167 = vmul.f32 %v1158, %v1166
  %v1168 = vadd.f32 %v1167, 1.1283791
  %v1169 = vmul.f32 %v327, %v1168
  %v1170 = vmul.f32 %v1158, 3.8918573e-05
  %v1171 = vadd.f32 %v1170, 0.001143296
  %v1172 = vmul.f32 %v1158, %v1171
  %v1173 = vadd.f32 %v1172, 0.014752088
  %v1174 = vmul.f32 %v1158, %v1173
  %v1175 = vadd.f32 %v1174, 0.112945676
  %v1176 = vmul.f32 %v1158, %v1175
  %v1177 = vadd.f32 %v1176, 0.4994258
  %v1178 = vmul.f32 %v1158, %v1177
  %v1179 = vadd.f32 %v1178, 1.0
  %v1180 = vrcp.pop %v1179
  %v1181 = vmul.f32 %v1179, %v1180
  %v1182 = vsub.f32 1.0, %v1181
  %v1183 = vmul.f32 %v1180, %v1182
  %v1184 = vadd.f32 %v1180, %v1183
  %vm1185 = vweird.f32 %v1179
  %vm1186 = vweird.f32 %v1180
  %vm1187 = vmor %vm1185, %vm1186
  %v1188 = vsel %vm1187, %v1180, %v1184
  %v1189 = vand.u32 2147483647, %v1179
  %vm1190 = vcmp.eq.f32.partialorder %v1189, 8.507059e+37
  %v1191 = vand.u32 %v1179, 2147483648
  %v1192 = vor.u32 1.1754944e-38, %v1191
  %v1193 = vsel %vm1190, %v1192, %v1188
  %v1194 = vmul.f32 %v1169, %v1193
  %v1195 = vmin.f32 %v1194, 1.0
  %v1196 = vmax.f32 %v1195, -1.0
  %v1197 = vmul.f32 %v328, %v328
  %v1198 = vmin.f32 16.0, %v1197
  %v1199 = vmul.f32 %v1198, 2.1237322e-06
  %v1200 = vadd.f32 %v1199, 0.00028619796
  %v1201 = vmul.f32 %v1198, %v1200
  %v1202 = vadd.f32 %v1201, 0.0036580483
  %v1203 = vmul.f32 %v1198, %v1202
  %v1204 = vadd.f32 %v1203, 0.05243302
  %v1205 = vmul.f32 %v1198, %v1204
  %v1206 = vadd.f32 %v1205, 0.18741608
  %v1207 = vmul.f32 %v1198, %v1206
  %v1208 = vadd.f32 %v1207, 1.1283791
  %v1209 = vmul.f32 %v328, %v1208
  %v1210 = vmul.f32 %v1198, 3.8918573e-05
  %v1211 = vadd.f32 %v1210, 0.001143296
  %v1212 = vmul.f32 %v1198, %v1211
  %v1213 = vadd.f32 %v1212, 0.014752088
  %v1214 = vmul.f32 %v1198, %v1213
  %v1215 = vadd.f32 %v1214, 0.112945676
  %v1216 = vmul.f32 %v1198, %v1215
  %v1217 = vadd.f32 %v1216, 0.4994258
  %v1218 = vmul.f32 %v1198, %v1217
  %v1219 = vadd.f32 %v1218, 1.0
  %v1220 = vrcp.pop %v1219
  %v1221 = vmul.f32 %v1219, %v1220
  %v1222 = vsub.f32 1.0, %v1221
  %v1223 = vmul.f32 %v1220, %v1222
  %v1224 = vadd.f32 %v1220, %v1223
  %vm1225 = vweird.f32 %v1219
  %vm1226 = vweird.f32 %v1220
  %vm1227 = vmor %vm1225, %vm1226
  %v1228 = vsel %vm1227, %v1220, %v1224
  %v1229 = vand.u32 2147483647, %v1219
  %vm1230 = vcmp.eq.f32.partialorder %v1229, 8.507059e+37
  %v1231 = vand.u32 %v1219, 2147483648
  %v1232 = vor.u32 1.1754944e-38, %v1231
  %v1233 = vsel %vm1230, %v1232, %v1228
  %v1234 = vmul.f32 %v1209, %v1233
  %v1235 = vmin.f32 %v1234, 1.0
  %v1236 = vmax.f32 %v1235, -1.0
  %v1237 = vmul.f32 %v329, %v329
  %v1238 = vmin.f32 16.0, %v1237
  %v1239 = vmul.f32 %v1238, 2.1237322e-06
  %v1240 = vadd.f32 %v1239, 0.00028619796
  %v1241 = vmul.f32 %v1238, %v1240
  %v1242 = vadd.f32 %v1241, 0.0036580483
  %v1243 = vmul.f32 %v1238, %v1242
  %v1244 = vadd.f32 %v1243, 0.05243302
  %v1245 = vmul.f32 %v1238, %v1244
  %v1246 = vadd.f32 %v1245, 0.18741608
  %v1247 = vmul.f32 %v1238, %v1246
  %v1248 = vadd.f32 %v1247, 1.1283791
  %v1249 = vmul.f32 %v329, %v1248
  %v1250 = vmul.f32 %v1238, 3.8918573e-05
  %v1251 = vadd.f32 %v1250, 0.001143296
  %v1252 = vmul.f32 %v1238, %v1251
  %v1253 = vadd.f32 %v1252, 0.014752088
  %v1254 = vmul.f32 %v1238, %v1253
  %v1255 = vadd.f32 %v1254, 0.112945676
  %v1256 = vmul.f32 %v1238, %v1255
  %v1257 = vadd.f32 %v1256, 0.4994258
  %v1258 = vmul.f32 %v1238, %v1257
  %v1259 = vadd.f32 %v1258, 1.0
  %v1260 = vrcp.pop %v1259
  %v1261 = vmul.f32 %v1259, %v1260
  %v1262 = vsub.f32 1.0, %v1261
  %v1263 = vmul.f32 %v1260, %v1262
  %v1264 = vadd.f32 %v1260, %v1263
  %vm1265 = vweird.f32 %v1259
  %vm1266 = vweird.f32 %v1260
  %vm1267 = vmor %vm1265, %vm1266
  %v1268 = vsel %vm1267, %v1260, %v1264
  %v1269 = vand.u32 2147483647, %v1259
  %vm1270 = vcmp.eq.f32.partialorder %v1269, 8.507059e+37
  %v1271 = vand.u32 %v1259, 2147483648
  %v1272 = vor.u32 1.1754944e-38, %v1271
  %v1273 = vsel %vm1270, %v1272, %v1268
  %v1274 = vmul.f32 %v1249, %v1273
  %v1275 = vmin.f32 %v1274, 1.0
  %v1276 = vmax.f32 %v1275, -1.0
  %v1277 = vmul.f32 %v330, %v330
  %v1278 = vmin.f32 16.0, %v1277
  %v1279 = vmul.f32 %v1278, 2.1237322e-06
  %v1280 = vadd.f32 %v1279, 0.00028619796
  %v1281 = vmul.f32 %v1278, %v1280
  %v1282 = vadd.f32 %v1281, 0.0036580483
  %v1283 = vmul.f32 %v1278, %v1282
  %v1284 = vadd.f32 %v1283, 0.05243302
  %v1285 = vmul.f32 %v1278, %v1284
  %v1286 = vadd.f32 %v1285, 0.18741608
  %v1287 = vmul.f32 %v1278, %v1286
  %v1288 = vadd.f32 %v1287, 1.1283791
  %v1289 = vmul.f32 %v330, %v1288
  %v1290 = vmul.f32 %v1278, 3.8918573e-05
  %v1291 = vadd.f32 %v1290, 0.001143296
  %v1292 = vmul.f32 %v1278, %v1291
  %v1293 = vadd.f32 %v1292, 0.014752088
  %v1294 = vmul.f32 %v1278, %v1293
  %v1295 = vadd.f32 %v1294, 0.112945676
  %v1296 = vmul.f32 %v1278, %v1295
  %v1297 = vadd.f32 %v1296, 0.4994258
  %v1298 = vmul.f32 %v1278, %v1297
  %v1299 = vadd.f32 %v1298, 1.0
  %v1300 = vrcp.pop %v1299
  %v1301 = vmul.f32 %v1299, %v1300
  %v1302 = vsub.f32 1.0, %v1301
  %v1303 = vmul.f32 %v1300, %v1302
  %v1304 = vadd.f32 %v1300, %v1303
  %vm1305 = vweird.f32 %v1299
  %vm1306 = vweird.f32 %v1300
  %vm1307 = vmor %vm1305, %vm1306
  %v1308 = vsel %vm1307, %v1300, %v1304
  %v1309 = vand.u32 2147483647, %v1299
  %vm1310 = vcmp.eq.f32.partialorder %v1309, 8.507059e+37
  %v1311 = vand.u32 %v1299, 2147483648
  %v1312 = vor.u32 1.1754944e-38, %v1311
  %v1313 = vsel %vm1310, %v1312, %v1308
  %v1314 = vmul.f32 %v1289, %v1313
  %v1315 = vmin.f32 %v1314, 1.0
  %v1316 = vmax.f32 %v1315, -1.0
  %v1317 = vmul.f32 %v331, %v331
  %v1318 = vmin.f32 16.0, %v1317
  %v1319 = vmul.f32 %v1318, 2.1237322e-06
  %v1320 = vadd.f32 %v1319, 0.00028619796
  %v1321 = vmul.f32 %v1318, %v1320
  %v1322 = vadd.f32 %v1321, 0.0036580483
  %v1323 = vmul.f32 %v1318, %v1322
  %v1324 = vadd.f32 %v1323, 0.05243302
  %v1325 = vmul.f32 %v1318, %v1324
  %v1326 = vadd.f32 %v1325, 0.18741608
  %v1327 = vmul.f32 %v1318, %v1326
  %v1328 = vadd.f32 %v1327, 1.1283791
  %v1329 = vmul.f32 %v331, %v1328
  %v1330 = vmul.f32 %v1318, 3.8918573e-05
  %v1331 = vadd.f32 %v1330, 0.001143296
  %v1332 = vmul.f32 %v1318, %v1331
  %v1333 = vadd.f32 %v1332, 0.014752088
  %v1334 = vmul.f32 %v1318, %v1333
  %v1335 = vadd.f32 %v1334, 0.112945676
  %v1336 = vmul.f32 %v1318, %v1335
  %v1337 = vadd.f32 %v1336, 0.4994258
  %v1338 = vmul.f32 %v1318, %v1337
  %v1339 = vadd.f32 %v1338, 1.0
  %v1340 = vrcp.pop %v1339
  %v1341 = vmul.f32 %v1339, %v1340
  %v1342 = vsub.f32 1.0, %v1341
  %v1343 = vmul.f32 %v1340, %v1342
  %v1344 = vadd.f32 %v1340, %v1343
  %vm1345 = vweird.f32 %v1339
  %vm1346 = vweird.f32 %v1340
  %vm1347 = vmor %vm1345, %vm1346
  %v1348 = vsel %vm1347, %v1340, %v1344
  %v1349 = vand.u32 2147483647, %v1339
  %vm1350 = vcmp.eq.f32.partialorder %v1349, 8.507059e+37
  %v1351 = vand.u32 %v1339, 2147483648
  %v1352 = vor.u32 1.1754944e-38, %v1351
  %v1353 = vsel %vm1350, %v1352, %v1348
  %v1354 = vmul.f32 %v1329, %v1353
  %v1355 = vmin.f32 %v1354, 1.0
  %v1356 = vmax.f32 %v1355, -1.0
  %v1357 = vmul.f32 %v332, %v332
  %v1358 = vmin.f32 16.0, %v1357
  %v1359 = vmul.f32 %v1358, 2.1237322e-06
  %v1360 = vadd.f32 %v1359, 0.00028619796
  %v1361 = vmul.f32 %v1358, %v1360
  %v1362 = vadd.f32 %v1361, 0.0036580483
  %v1363 = vmul.f32 %v1358, %v1362
  %v1364 = vadd.f32 %v1363, 0.05243302
  %v1365 = vmul.f32 %v1358, %v1364
  %v1366 = vadd.f32 %v1365, 0.18741608
  %v1367 = vmul.f32 %v1358, %v1366
  %v1368 = vadd.f32 %v1367, 1.1283791
  %v1369 = vmul.f32 %v332, %v1368
  %v1370 = vmul.f32 %v1358, 3.8918573e-05
  %v1371 = vadd.f32 %v1370, 0.001143296
  %v1372 = vmul.f32 %v1358, %v1371
  %v1373 = vadd.f32 %v1372, 0.014752088
  %v1374 = vmul.f32 %v1358, %v1373
  %v1375 = vadd.f32 %v1374, 0.112945676
  %v1376 = vmul.f32 %v1358, %v1375
  %v1377 = vadd.f32 %v1376, 0.4994258
  %v1378 = vmul.f32 %v1358, %v1377
  %v1379 = vadd.f32 %v1378, 1.0
  %v1380 = vrcp.pop %v1379
  %v1381 = vmul.f32 %v1379, %v1380
  %v1382 = vsub.f32 1.0, %v1381
  %v1383 = vmul.f32 %v1380, %v1382
  %v1384 = vadd.f32 %v1380, %v1383
  %vm1385 = vweird.f32 %v1379
  %vm1386 = vweird.f32 %v1380
  %vm1387 = vmor %vm1385, %vm1386
  %v1388 = vsel %vm1387, %v1380, %v1384
  %v1389 = vand.u32 2147483647, %v1379
  %vm1390 = vcmp.eq.f32.partialorder %v1389, 8.507059e+37
  %v1391 = vand.u32 %v1379, 2147483648
  %v1392 = vor.u32 1.1754944e-38, %v1391
  %v1393 = vsel %vm1390, %v1392, %v1388
  %v1394 = vmul.f32 %v1369, %v1393
  %v1395 = vmin.f32 %v1394, 1.0
  %v1396 = vmax.f32 %v1395, -1.0
  %v1397 = vmul.f32 %v333, %v333
  %v1398 = vmin.f32 16.0, %v1397
  %v1399 = vmul.f32 %v1398, 2.1237322e-06
  %v1400 = vadd.f32 %v1399, 0.00028619796
  %v1401 = vmul.f32 %v1398, %v1400
  %v1402 = vadd.f32 %v1401, 0.0036580483
  %v1403 = vmul.f32 %v1398, %v1402
  %v1404 = vadd.f32 %v1403, 0.05243302
  %v1405 = vmul.f32 %v1398, %v1404
  %v1406 = vadd.f32 %v1405, 0.18741608
  %v1407 = vmul.f32 %v1398, %v1406
  %v1408 = vadd.f32 %v1407, 1.1283791
  %v1409 = vmul.f32 %v333, %v1408
  %v1410 = vmul.f32 %v1398, 3.8918573e-05
  %v1411 = vadd.f32 %v1410, 0.001143296
  %v1412 = vmul.f32 %v1398, %v1411
  %v1413 = vadd.f32 %v1412, 0.014752088
  %v1414 = vmul.f32 %v1398, %v1413
  %v1415 = vadd.f32 %v1414, 0.112945676
  %v1416 = vmul.f32 %v1398, %v1415
  %v1417 = vadd.f32 %v1416, 0.4994258
  %v1418 = vmul.f32 %v1398, %v1417
  %v1419 = vadd.f32 %v1418, 1.0
  %v1420 = vrcp.pop %v1419
  %v1421 = vmul.f32 %v1419, %v1420
  %v1422 = vsub.f32 1.0, %v1421
  %v1423 = vmul.f32 %v1420, %v1422
  %v1424 = vadd.f32 %v1420, %v1423
  %vm1425 = vweird.f32 %v1419
  %vm1426 = vweird.f32 %v1420
  %vm1427 = vmor %vm1425, %vm1426
  %v1428 = vsel %vm1427, %v1420, %v1424
  %v1429 = vand.u32 2147483647, %v1419
  %vm1430 = vcmp.eq.f32.partialorder %v1429, 8.507059e+37
  %v1431 = vand.u32 %v1419, 2147483648
  %v1432 = vor.u32 1.1754944e-38, %v1431
  %v1433 = vsel %vm1430, %v1432, %v1428
  %v1434 = vmul.f32 %v1409, %v1433
  %v1435 = vmin.f32 %v1434, 1.0
  %v1436 = vmax.f32 %v1435, -1.0
  %v1437 = vmul.f32 %v334, %v334
  %v1438 = vmin.f32 16.0, %v1437
  %v1439 = vmul.f32 %v1438, 2.1237322e-06
  %v1440 = vadd.f32 %v1439, 0.00028619796
  %v1441 = vmul.f32 %v1438, %v1440
  %v1442 = vadd.f32 %v1441, 0.0036580483
  %v1443 = vmul.f32 %v1438, %v1442
  %v1444 = vadd.f32 %v1443, 0.05243302
  %v1445 = vmul.f32 %v1438, %v1444
  %v1446 = vadd.f32 %v1445, 0.18741608
  %v1447 = vmul.f32 %v1438, %v1446
  %v1448 = vadd.f32 %v1447, 1.1283791
  %v1449 = vmul.f32 %v334, %v1448
  %v1450 = vmul.f32 %v1438, 3.8918573e-05
  %v1451 = vadd.f32 %v1450, 0.001143296
  %v1452 = vmul.f32 %v1438, %v1451
  %v1453 = vadd.f32 %v1452, 0.014752088
  %v1454 = vmul.f32 %v1438, %v1453
  %v1455 = vadd.f32 %v1454, 0.112945676
  %v1456 = vmul.f32 %v1438, %v1455
  %v1457 = vadd.f32 %v1456, 0.4994258
  %v1458 = vmul.f32 %v1438, %v1457
  %v1459 = vadd.f32 %v1458, 1.0
  %v1460 = vrcp.pop %v1459
  %v1461 = vmul.f32 %v1459, %v1460
  %v1462 = vsub.f32 1.0, %v1461
  %v1463 = vmul.f32 %v1460, %v1462
  %v1464 = vadd.f32 %v1460, %v1463
  %vm1465 = vweird.f32 %v1459
  %vm1466 = vweird.f32 %v1460
  %vm1467 = vmor %vm1465, %vm1466
  %v1468 = vsel %vm1467, %v1460, %v1464
  %v1469 = vand.u32 2147483647, %v1459
  %vm1470 = vcmp.eq.f32.partialorder %v1469, 8.507059e+37
  %v1471 = vand.u32 %v1459, 2147483648
  %v1472 = vor.u32 1.1754944e-38, %v1471
  %v1473 = vsel %vm1470, %v1472, %v1468
  %v1474 = vmul.f32 %v1449, %v1473
  %v1475 = vmin.f32 %v1474, 1.0
  %v1476 = vmax.f32 %v1475, -1.0
  %v1477 = vmul.f32 %v335, %v335
  %v1478 = vmin.f32 16.0, %v1477
  %v1479 = vmul.f32 %v1478, 2.1237322e-06
  %v1480 = vadd.f32 %v1479, 0.00028619796
  %v1481 = vmul.f32 %v1478, %v1480
  %v1482 = vadd.f32 %v1481, 0.0036580483
  %v1483 = vmul.f32 %v1478, %v1482
  %v1484 = vadd.f32 %v1483, 0.05243302
  %v1485 = vmul.f32 %v1478, %v1484
  %v1486 = vadd.f32 %v1485, 0.18741608
  %v1487 = vmul.f32 %v1478, %v1486
  %v1488 = vadd.f32 %v1487, 1.1283791
  %v1489 = vmul.f32 %v335, %v1488
  %v1490 = vmul.f32 %v1478, 3.8918573e-05
  %v1491 = vadd.f32 %v1490, 0.001143296
  %v1492 = vmul.f32 %v1478, %v1491
  %v1493 = vadd.f32 %v1492, 0.014752088
  %v1494 = vmul.f32 %v1478, %v1493
  %v1495 = vadd.f32 %v1494, 0.112945676
  %v1496 = vmul.f32 %v1478, %v1495
  %v1497 = vadd.f32 %v1496, 0.4994258
  %v1498 = vmul.f32 %v1478, %v1497
  %v1499 = vadd.f32 %v1498, 1.0
  %v1500 = vrcp.pop %v1499
  %v1501 = vmul.f32 %v1499, %v1500
  %v1502 = vsub.f32 1.0, %v1501
  %v1503 = vmul.f32 %v1500, %v1502
  %v1504 = vadd.f32 %v1500, %v1503
  %vm1505 = vweird.f32 %v1499
  %vm1506 = vweird.f32 %v1500
  %vm1507 = vmor %vm1505, %vm1506
  %v1508 = vsel %vm1507, %v1500, %v1504
  %v1509 = vand.u32 2147483647, %v1499
  %vm1510 = vcmp.eq.f32.partialorder %v1509, 8.507059e+37
  %v1511 = vand.u32 %v1499, 2147483648
  %v1512 = vor.u32 1.1754944e-38, %v1511
  %v1513 = vsel %vm1510, %v1512, %v1508
  %v1514 = vmul.f32 %v1489, %v1513
  %v1515 = vmin.f32 %v1514, 1.0
  %v1516 = vmax.f32 %v1515, -1.0
  %v1517 = vmul.f32 %v336, %v336
  %v1518 = vmin.f32 16.0, %v1517
  %v1519 = vmul.f32 %v1518, 2.1237322e-06
  %v1520 = vadd.f32 %v1519, 0.00028619796
  %v1521 = vmul.f32 %v1518, %v1520
  %v1522 = vadd.f32 %v1521, 0.0036580483
  %v1523 = vmul.f32 %v1518, %v1522
  %v1524 = vadd.f32 %v1523, 0.05243302
  %v1525 = vmul.f32 %v1518, %v1524
  %v1526 = vadd.f32 %v1525, 0.18741608
  %v1527 = vmul.f32 %v1518, %v1526
  %v1528 = vadd.f32 %v1527, 1.1283791
  %v1529 = vmul.f32 %v336, %v1528
  %v1530 = vmul.f32 %v1518, 3.8918573e-05
  %v1531 = vadd.f32 %v1530, 0.001143296
  %v1532 = vmul.f32 %v1518, %v1531
  %v1533 = vadd.f32 %v1532, 0.014752088
  %v1534 = vmul.f32 %v1518, %v1533
  %v1535 = vadd.f32 %v1534, 0.112945676
  %v1536 = vmul.f32 %v1518, %v1535
  %v1537 = vadd.f32 %v1536, 0.4994258
  %v1538 = vmul.f32 %v1518, %v1537
  %v1539 = vadd.f32 %v1538, 1.0
  %v1540 = vrcp.pop %v1539
  %v1541 = vmul.f32 %v1539, %v1540
  %v1542 = vsub.f32 1.0, %v1541
  %v1543 = vmul.f32 %v1540, %v1542
  %v1544 = vadd.f32 %v1540, %v1543
  %vm1545 = vweird.f32 %v1539
  %vm1546 = vweird.f32 %v1540
  %vm1547 = vmor %vm1545, %vm1546
  %v1548 = vsel %vm1547, %v1540, %v1544
  %v1549 = vand.u32 2147483647, %v1539
  %vm1550 = vcmp.eq.f32.partialorder %v1549, 8.507059e+37
  %v1551 = vand.u32 %v1539, 2147483648
  %v1552 = vor.u32 1.1754944e-38, %v1551
  %v1553 = vsel %vm1550, %v1552, %v1548
  %v1554 = vmul.f32 %v1529, %v1553
  %v1555 = vmin.f32 %v1554, 1.0
  %v1556 = vmax.f32 %v1555, -1.0
  %v1557 = vmul.f32 %v337, %v337
  %v1558 = vmin.f32 16.0, %v1557
  %v1559 = vmul.f32 %v1558, 2.1237322e-06
  %v1560 = vadd.f32 %v1559, 0.00028619796
  %v1561 = vmul.f32 %v1558, %v1560
  %v1562 = vadd.f32 %v1561, 0.0036580483
  %v1563 = vmul.f32 %v1558, %v1562
  %v1564 = vadd.f32 %v1563, 0.05243302
  %v1565 = vmul.f32 %v1558, %v1564
  %v1566 = vadd.f32 %v1565, 0.18741608
  %v1567 = vmul.f32 %v1558, %v1566
  %v1568 = vadd.f32 %v1567, 1.1283791
  %v1569 = vmul.f32 %v337, %v1568
  %v1570 = vmul.f32 %v1558, 3.8918573e-05
  %v1571 = vadd.f32 %v1570, 0.001143296
  %v1572 = vmul.f32 %v1558, %v1571
  %v1573 = vadd.f32 %v1572, 0.014752088
  %v1574 = vmul.f32 %v1558, %v1573
  %v1575 = vadd.f32 %v1574, 0.112945676
  %v1576 = vmul.f32 %v1558, %v1575
  %v1577 = vadd.f32 %v1576, 0.4994258
  %v1578 = vmul.f32 %v1558, %v1577
  %v1579 = vadd.f32 %v1578, 1.0
  %v1580 = vrcp.pop %v1579
  %v1581 = vmul.f32 %v1579, %v1580
  %v1582 = vsub.f32 1.0, %v1581
  %v1583 = vmul.f32 %v1580, %v1582
  %v1584 = vadd.f32 %v1580, %v1583
  %vm1585 = vweird.f32 %v1579
  %vm1586 = vweird.f32 %v1580
  %vm1587 = vmor %vm1585, %vm1586
  %v1588 = vsel %vm1587, %v1580, %v1584
  %v1589 = vand.u32 2147483647, %v1579
  %vm1590 = vcmp.eq.f32.partialorder %v1589, 8.507059e+37
  %v1591 = vand.u32 %v1579, 2147483648
  %v1592 = vor.u32 1.1754944e-38, %v1591
  %v1593 = vsel %vm1590, %v1592, %v1588
  %v1594 = vmul.f32 %v1569, %v1593
  %v1595 = vmin.f32 %v1594, 1.0
  %v1596 = vmax.f32 %v1595, -1.0
  %v1597 = vmul.f32 %v338, %v338
  %v1598 = vmin.f32 16.0, %v1597
  %v1599 = vmul.f32 %v1598, 2.1237322e-06
  %v1600 = vadd.f32 %v1599, 0.00028619796
  %v1601 = vmul.f32 %v1598, %v1600
  %v1602 = vadd.f32 %v1601, 0.0036580483
  %v1603 = vmul.f32 %v1598, %v1602
  %v1604 = vadd.f32 %v1603, 0.05243302
  %v1605 = vmul.f32 %v1598, %v1604
  %v1606 = vadd.f32 %v1605, 0.18741608
  %v1607 = vmul.f32 %v1598, %v1606
  %v1608 = vadd.f32 %v1607, 1.1283791
  %v1609 = vmul.f32 %v338, %v1608
  %v1610 = vmul.f32 %v1598, 3.8918573e-05
  %v1611 = vadd.f32 %v1610, 0.001143296
  %v1612 = vmul.f32 %v1598, %v1611
  %v1613 = vadd.f32 %v1612, 0.014752088
  %v1614 = vmul.f32 %v1598, %v1613
  %v1615 = vadd.f32 %v1614, 0.112945676
  %v1616 = vmul.f32 %v1598, %v1615
  %v1617 = vadd.f32 %v1616, 0.4994258
  %v1618 = vmul.f32 %v1598, %v1617
  %v1619 = vadd.f32 %v1618, 1.0
  %v1620 = vrcp.pop %v1619
  %v1621 = vmul.f32 %v1619, %v1620
  %v1622 = vsub.f32 1.0, %v1621
  %v1623 = vmul.f32 %v1620, %v1622
  %v1624 = vadd.f32 %v1620, %v1623
  %vm1625 = vweird.f32 %v1619
  %vm1626 = vweird.f32 %v1620
  %vm1627 = vmor %vm1625, %vm1626
  %v1628 = vsel %vm1627, %v1620, %v1624
  %v1629 = vand.u32 2147483647, %v1619
  %vm1630 = vcmp.eq.f32.partialorder %v1629, 8.507059e+37
  %v1631 = vand.u32 %v1619, 2147483648
  %v1632 = vor.u32 1.1754944e-38, %v1631
  %v1633 = vsel %vm1630, %v1632, %v1628
  %v1634 = vmul.f32 %v1609, %v1633
  %v1635 = vmin.f32 %v1634, 1.0
  %v1636 = vmax.f32 %v1635, -1.0
  %v1637 = vmul.f32 %v339, %v339
  %v1638 = vmin.f32 16.0, %v1637
  %v1639 = vmul.f32 %v1638, 2.1237322e-06
  %v1640 = vadd.f32 %v1639, 0.00028619796
  %v1641 = vmul.f32 %v1638, %v1640
  %v1642 = vadd.f32 %v1641, 0.0036580483
  %v1643 = vmul.f32 %v1638, %v1642
  %v1644 = vadd.f32 %v1643, 0.05243302
  %v1645 = vmul.f32 %v1638, %v1644
  %v1646 = vadd.f32 %v1645, 0.18741608
  %v1647 = vmul.f32 %v1638, %v1646
  %v1648 = vadd.f32 %v1647, 1.1283791
  %v1649 = vmul.f32 %v339, %v1648
  %v1650 = vmul.f32 %v1638, 3.8918573e-05
  %v1651 = vadd.f32 %v1650, 0.001143296
  %v1652 = vmul.f32 %v1638, %v1651
  %v1653 = vadd.f32 %v1652, 0.014752088
  %v1654 = vmul.f32 %v1638, %v1653
  %v1655 = vadd.f32 %v1654, 0.112945676
  %v1656 = vmul.f32 %v1638, %v1655
  %v1657 = vadd.f32 %v1656, 0.4994258
  %v1658 = vmul.f32 %v1638, %v1657
  %v1659 = vadd.f32 %v1658, 1.0
  %v1660 = vrcp.pop %v1659
  %v1661 = vmul.f32 %v1659, %v1660
  %v1662 = vsub.f32 1.0, %v1661
  %v1663 = vmul.f32 %v1660, %v1662
  %v1664 = vadd.f32 %v1660, %v1663
  %vm1665 = vweird.f32 %v1659
  %vm1666 = vweird.f32 %v1660
  %vm1667 = vmor %vm1665, %vm1666
  %v1668 = vsel %vm1667, %v1660, %v1664
  %v1669 = vand.u32 2147483647, %v1659
  %vm1670 = vcmp.eq.f32.partialorder %v1669, 8.507059e+37
  %v1671 = vand.u32 %v1659, 2147483648
  %v1672 = vor.u32 1.1754944e-38, %v1671
  %v1673 = vsel %vm1670, %v1672, %v1668
  %v1674 = vmul.f32 %v1649, %v1673
  %v1675 = vmin.f32 %v1674, 1.0
  %v1676 = vmax.f32 %v1675, -1.0
  %v1677 = vmul.f32 %v340, %v340
  %v1678 = vmin.f32 16.0, %v1677
  %v1679 = vmul.f32 %v1678, 2.1237322e-06
  %v1680 = vadd.f32 %v1679, 0.00028619796
  %v1681 = vmul.f32 %v1678, %v1680
  %v1682 = vadd.f32 %v1681, 0.0036580483
  %v1683 = vmul.f32 %v1678, %v1682
  %v1684 = vadd.f32 %v1683, 0.05243302
  %v1685 = vmul.f32 %v1678, %v1684
  %v1686 = vadd.f32 %v1685, 0.18741608
  %v1687 = vmul.f32 %v1678, %v1686
  %v1688 = vadd.f32 %v1687, 1.1283791
  %v1689 = vmul.f32 %v340, %v1688
  %v1690 = vmul.f32 %v1678, 3.8918573e-05
  %v1691 = vadd.f32 %v1690, 0.001143296
  %v1692 = vmul.f32 %v1678, %v1691
  %v1693 = vadd.f32 %v1692, 0.014752088
  %v1694 = vmul.f32 %v1678, %v1693
  %v1695 = vadd.f32 %v1694, 0.112945676
  %v1696 = vmul.f32 %v1678, %v1695
  %v1697 = vadd.f32 %v1696, 0.4994258
  %v1698 = vmul.f32 %v1678, %v1697
  %v1699 = vadd.f32 %v1698, 1.0
  %v1700 = vrcp.pop %v1699
  %v1701 = vmul.f32 %v1699, %v1700
  %v1702 = vsub.f32 1.0, %v1701
  %v1703 = vmul.f32 %v1700, %v1702
  %v1704 = vadd.f32 %v1700, %v1703
  %vm1705 = vweird.f32 %v1699
  %vm1706 = vweird.f32 %v1700
  %vm1707 = vmor %vm1705, %vm1706
  %v1708 = vsel %vm1707, %v1700, %v1704
  %v1709 = vand.u32 2147483647, %v1699
  %vm1710 = vcmp.eq.f32.partialorder %v1709, 8.507059e+37
  %v1711 = vand.u32 %v1699, 2147483648
  %v1712 = vor.u32 1.1754944e-38, %v1711
  %v1713 = vsel %vm1710, %v1712, %v1708
  %v1714 = vmul.f32 %v1689, %v1713
  %v1715 = vmin.f32 %v1714, 1.0
  %v1716 = vmax.f32 %v1715, -1.0
  %v1717 = vmul.f32 %v341, %v341
  %v1718 = vmin.f32 16.0, %v1717
  %v1719 = vmul.f32 %v1718, 2.1237322e-06
  %v1720 = vadd.f32 %v1719, 0.00028619796
  %v1721 = vmul.f32 %v1718, %v1720
  %v1722 = vadd.f32 %v1721, 0.0036580483
  %v1723 = vmul.f32 %v1718, %v1722
  %v1724 = vadd.f32 %v1723, 0.05243302
  %v1725 = vmul.f32 %v1718, %v1724
  %v1726 = vadd.f32 %v1725, 0.18741608
  %v1727 = vmul.f32 %v1718, %v1726
  %v1728 = vadd.f32 %v1727, 1.1283791
  %v1729 = vmul.f32 %v341, %v1728
  %v1730 = vmul.f32 %v1718, 3.8918573e-05
  %v1731 = vadd.f32 %v1730, 0.001143296
  %v1732 = vmul.f32 %v1718, %v1731
  %v1733 = vadd.f32 %v1732, 0.014752088
  %v1734 = vmul.f32 %v1718, %v1733
  %v1735 = vadd.f32 %v1734, 0.112945676
  %v1736 = vmul.f32 %v1718, %v1735
  %v1737 = vadd.f32 %v1736, 0.4994258
  %v1738 = vmul.f32 %v1718, %v1737
  %v1739 = vadd.f32 %v1738, 1.0
  %v1740 = vrcp.pop %v1739
  %v1741 = vmul.f32 %v1739, %v1740
  %v1742 = vsub.f32 1.0, %v1741
  %v1743 = vmul.f32 %v1740, %v1742
  %v1744 = vadd.f32 %v1740, %v1743
  %vm1745 = vweird.f32 %v1739
  %vm1746 = vweird.f32 %v1740
  %vm1747 = vmor %vm1745, %vm1746
  %v1748 = vsel %vm1747, %v1740, %v1744
  %v1749 = vand.u32 2147483647, %v1739
  %vm1750 = vcmp.eq.f32.partialorder %v1749, 8.507059e+37
  %v1751 = vand.u32 %v1739, 2147483648
  %v1752 = vor.u32 1.1754944e-38, %v1751
  %v1753 = vsel %vm1750, %v1752, %v1748
  %v1754 = vmul.f32 %v1729, %v1753
  %v1755 = vmin.f32 %v1754, 1.0
  %v1756 = vmax.f32 %v1755, -1.0
  %v1757 = vmul.f32 %v342, %v342
  %v1758 = vmin.f32 16.0, %v1757
  %v1759 = vmul.f32 %v1758, 2.1237322e-06
  %v1760 = vadd.f32 %v1759, 0.00028619796
  %v1761 = vmul.f32 %v1758, %v1760
  %v1762 = vadd.f32 %v1761, 0.0036580483
  %v1763 = vmul.f32 %v1758, %v1762
  %v1764 = vadd.f32 %v1763, 0.05243302
  %v1765 = vmul.f32 %v1758, %v1764
  %v1766 = vadd.f32 %v1765, 0.18741608
  %v1767 = vmul.f32 %v1758, %v1766
  %v1768 = vadd.f32 %v1767, 1.1283791
  %v1769 = vmul.f32 %v342, %v1768
  %v1770 = vmul.f32 %v1758, 3.8918573e-05
  %v1771 = vadd.f32 %v1770, 0.001143296
  %v1772 = vmul.f32 %v1758, %v1771
  %v1773 = vadd.f32 %v1772, 0.014752088
  %v1774 = vmul.f32 %v1758, %v1773
  %v1775 = vadd.f32 %v1774, 0.112945676
  %v1776 = vmul.f32 %v1758, %v1775
  %v1777 = vadd.f32 %v1776, 0.4994258
  %v1778 = vmul.f32 %v1758, %v1777
  %v1779 = vadd.f32 %v1778, 1.0
  %v1780 = vrcp.pop %v1779
  %v1781 = vmul.f32 %v1779, %v1780
  %v1782 = vsub.f32 1.0, %v1781
  %v1783 = vmul.f32 %v1780, %v1782
  %v1784 = vadd.f32 %v1780, %v1783
  %vm1785 = vweird.f32 %v1779
  %vm1786 = vweird.f32 %v1780
  %vm1787 = vmor %vm1785, %vm1786
  %v1788 = vsel %vm1787, %v1780, %v1784
  %v1789 = vand.u32 2147483647, %v1779
  %vm1790 = vcmp.eq.f32.partialorder %v1789, 8.507059e+37
  %v1791 = vand.u32 %v1779, 2147483648
  %v1792 = vor.u32 1.1754944e-38, %v1791
  %v1793 = vsel %vm1790, %v1792, %v1788
  %v1794 = vmul.f32 %v1769, %v1793
  %v1795 = vmin.f32 %v1794, 1.0
  %v1796 = vmax.f32 %v1795, -1.0
  %v1797 = vmul.f32 %v343, %v343
  %v1798 = vmin.f32 16.0, %v1797
  %v1799 = vmul.f32 %v1798, 2.1237322e-06
  %v1800 = vadd.f32 %v1799, 0.00028619796
  %v1801 = vmul.f32 %v1798, %v1800
  %v1802 = vadd.f32 %v1801, 0.0036580483
  %v1803 = vmul.f32 %v1798, %v1802
  %v1804 = vadd.f32 %v1803, 0.05243302
  %v1805 = vmul.f32 %v1798, %v1804
  %v1806 = vadd.f32 %v1805, 0.18741608
  %v1807 = vmul.f32 %v1798, %v1806
  %v1808 = vadd.f32 %v1807, 1.1283791
  %v1809 = vmul.f32 %v343, %v1808
  %v1810 = vmul.f32 %v1798, 3.8918573e-05
  %v1811 = vadd.f32 %v1810, 0.001143296
  %v1812 = vmul.f32 %v1798, %v1811
  %v1813 = vadd.f32 %v1812, 0.014752088
  %v1814 = vmul.f32 %v1798, %v1813
  %v1815 = vadd.f32 %v1814, 0.112945676
  %v1816 = vmul.f32 %v1798, %v1815
  %v1817 = vadd.f32 %v1816, 0.4994258
  %v1818 = vmul.f32 %v1798, %v1817
  %v1819 = vadd.f32 %v1818, 1.0
  %v1820 = vrcp.pop %v1819
  %v1821 = vmul.f32 %v1819, %v1820
  %v1822 = vsub.f32 1.0, %v1821
  %v1823 = vmul.f32 %v1820, %v1822
  %v1824 = vadd.f32 %v1820, %v1823
  %vm1825 = vweird.f32 %v1819
  %vm1826 = vweird.f32 %v1820
  %vm1827 = vmor %vm1825, %vm1826
  %v1828 = vsel %vm1827, %v1820, %v1824
  %v1829 = vand.u32 2147483647, %v1819
  %vm1830 = vcmp.eq.f32.partialorder %v1829, 8.507059e+37
  %v1831 = vand.u32 %v1819, 2147483648
  %v1832 = vor.u32 1.1754944e-38, %v1831
  %v1833 = vsel %vm1830, %v1832, %v1828
  %v1834 = vmul.f32 %v1809, %v1833
  %v1835 = vmin.f32 %v1834, 1.0
  %v1836 = vmax.f32 %v1835, -1.0
  %v1837 = vmul.f32 %v344, %v344
  %v1838 = vmin.f32 16.0, %v1837
  %v1839 = vmul.f32 %v1838, 2.1237322e-06
  %v1840 = vadd.f32 %v1839, 0.00028619796
  %v1841 = vmul.f32 %v1838, %v1840
  %v1842 = vadd.f32 %v1841, 0.0036580483
  %v1843 = vmul.f32 %v1838, %v1842
  %v1844 = vadd.f32 %v1843, 0.05243302
  %v1845 = vmul.f32 %v1838, %v1844
  %v1846 = vadd.f32 %v1845, 0.18741608
  %v1847 = vmul.f32 %v1838, %v1846
  %v1848 = vadd.f32 %v1847, 1.1283791
  %v1849 = vmul.f32 %v344, %v1848
  %v1850 = vmul.f32 %v1838, 3.8918573e-05
  %v1851 = vadd.f32 %v1850, 0.001143296
  %v1852 = vmul.f32 %v1838, %v1851
  %v1853 = vadd.f32 %v1852, 0.014752088
  %v1854 = vmul.f32 %v1838, %v1853
  %v1855 = vadd.f32 %v1854, 0.112945676
  %v1856 = vmul.f32 %v1838, %v1855
  %v1857 = vadd.f32 %v1856, 0.4994258
  %v1858 = vmul.f32 %v1838, %v1857
  %v1859 = vadd.f32 %v1858, 1.0
  %v1860 = vrcp.pop %v1859
  %v1861 = vmul.f32 %v1859, %v1860
  %v1862 = vsub.f32 1.0, %v1861
  %v1863 = vmul.f32 %v1860, %v1862
  %v1864 = vadd.f32 %v1860, %v1863
  %vm1865 = vweird.f32 %v1859
  %vm1866 = vweird.f32 %v1860
  %vm1867 = vmor %vm1865, %vm1866
  %v1868 = vsel %vm1867, %v1860, %v1864
  %v1869 = vand.u32 2147483647, %v1859
  %vm1870 = vcmp.eq.f32.partialorder %v1869, 8.507059e+37
  %v1871 = vand.u32 %v1859, 2147483648
  %v1872 = vor.u32 1.1754944e-38, %v1871
  %v1873 = vsel %vm1870, %v1872, %v1868
  %v1874 = vmul.f32 %v1849, %v1873
  %v1875 = vmin.f32 %v1874, 1.0
  %v1876 = vmax.f32 %v1875, -1.0
  %v1877 = vmul.f32 %v345, %v345
  %v1878 = vmin.f32 16.0, %v1877
  %v1879 = vmul.f32 %v1878, 2.1237322e-06
  %v1880 = vadd.f32 %v1879, 0.00028619796
  %v1881 = vmul.f32 %v1878, %v1880
  %v1882 = vadd.f32 %v1881, 0.0036580483
  %v1883 = vmul.f32 %v1878, %v1882
  %v1884 = vadd.f32 %v1883, 0.05243302
  %v1885 = vmul.f32 %v1878, %v1884
  %v1886 = vadd.f32 %v1885, 0.18741608
  %v1887 = vmul.f32 %v1878, %v1886
  %v1888 = vadd.f32 %v1887, 1.1283791
  %v1889 = vmul.f32 %v345, %v1888
  %v1890 = vmul.f32 %v1878, 3.8918573e-05
  %v1891 = vadd.f32 %v1890, 0.001143296
  %v1892 = vmul.f32 %v1878, %v1891
  %v1893 = vadd.f32 %v1892, 0.014752088
  %v1894 = vmul.f32 %v1878, %v1893
  %v1895 = vadd.f32 %v1894, 0.112945676
  %v1896 = vmul.f32 %v1878, %v1895
  %v1897 = vadd.f32 %v1896, 0.4994258
  %v1898 = vmul.f32 %v1878, %v1897
  %v1899 = vadd.f32 %v1898, 1.0
  %v1900 = vrcp.pop %v1899
  %v1901 = vmul.f32 %v1899, %v1900
  %v1902 = vsub.f32 1.0, %v1901
  %v1903 = vmul.f32 %v1900, %v1902
  %v1904 = vadd.f32 %v1900, %v1903
  %vm1905 = vweird.f32 %v1899
  %vm1906 = vweird.f32 %v1900
  %vm1907 = vmor %vm1905, %vm1906
  %v1908 = vsel %vm1907, %v1900, %v1904
  %v1909 = vand.u32 2147483647, %v1899
  %vm1910 = vcmp.eq.f32.partialorder %v1909, 8.507059e+37
  %v1911 = vand.u32 %v1899, 2147483648
  %v1912 = vor.u32 1.1754944e-38, %v1911
  %v1913 = vsel %vm1910, %v1912, %v1908
  %v1914 = vmul.f32 %v1889, %v1913
  %v1915 = vmin.f32 %v1914, 1.0
  %v1916 = vmax.f32 %v1915, -1.0
  %v1917 = vmul.f32 %v346, %v346
  %v1918 = vmin.f32 16.0, %v1917
  %v1919 = vmul.f32 %v1918, 2.1237322e-06
  %v1920 = vadd.f32 %v1919, 0.00028619796
  %v1921 = vmul.f32 %v1918, %v1920
  %v1922 = vadd.f32 %v1921, 0.0036580483
  %v1923 = vmul.f32 %v1918, %v1922
  %v1924 = vadd.f32 %v1923, 0.05243302
  %v1925 = vmul.f32 %v1918, %v1924
  %v1926 = vadd.f32 %v1925, 0.18741608
  %v1927 = vmul.f32 %v1918, %v1926
  %v1928 = vadd.f32 %v1927, 1.1283791
  %v1929 = vmul.f32 %v346, %v1928
  %v1930 = vmul.f32 %v1918, 3.8918573e-05
  %v1931 = vadd.f32 %v1930, 0.001143296
  %v1932 = vmul.f32 %v1918, %v1931
  %v1933 = vadd.f32 %v1932, 0.014752088
  %v1934 = vmul.f32 %v1918, %v1933
  %v1935 = vadd.f32 %v1934, 0.112945676
  %v1936 = vmul.f32 %v1918, %v1935
  %v1937 = vadd.f32 %v1936, 0.4994258
  %v1938 = vmul.f32 %v1918, %v1937
  %v1939 = vadd.f32 %v1938, 1.0
  %v1940 = vrcp.pop %v1939
  %v1941 = vmul.f32 %v1939, %v1940
  %v1942 = vsub.f32 1.0, %v1941
  %v1943 = vmul.f32 %v1940, %v1942
  %v1944 = vadd.f32 %v1940, %v1943
  %vm1945 = vweird.f32 %v1939
  %vm1946 = vweird.f32 %v1940
  %vm1947 = vmor %vm1945, %vm1946
  %v1948 = vsel %vm1947, %v1940, %v1944
  %v1949 = vand.u32 2147483647, %v1939
  %vm1950 = vcmp.eq.f32.partialorder %v1949, 8.507059e+37
  %v1951 = vand.u32 %v1939, 2147483648
  %v1952 = vor.u32 1.1754944e-38, %v1951
  %v1953 = vsel %vm1950, %v1952, %v1948
  %v1954 = vmul.f32 %v1929, %v1953
  %v1955 = vmin.f32 %v1954, 1.0
  %v1956 = vmax.f32 %v1955, -1.0
  %v1957 = vmul.f32 %v347, %v347
  %v1958 = vmin.f32 16.0, %v1957
  %v1959 = vmul.f32 %v1958, 2.1237322e-06
  %v1960 = vadd.f32 %v1959, 0.00028619796
  %v1961 = vmul.f32 %v1958, %v1960
  %v1962 = vadd.f32 %v1961, 0.0036580483
  %v1963 = vmul.f32 %v1958, %v1962
  %v1964 = vadd.f32 %v1963, 0.05243302
  %v1965 = vmul.f32 %v1958, %v1964
  %v1966 = vadd.f32 %v1965, 0.18741608
  %v1967 = vmul.f32 %v1958, %v1966
  %v1968 = vadd.f32 %v1967, 1.1283791
  %v1969 = vmul.f32 %v347, %v1968
  %v1970 = vmul.f32 %v1958, 3.8918573e-05
  %v1971 = vadd.f32 %v1970, 0.001143296
  %v1972 = vmul.f32 %v1958, %v1971
  %v1973 = vadd.f32 %v1972, 0.014752088
  %v1974 = vmul.f32 %v1958, %v1973
  %v1975 = vadd.f32 %v1974, 0.112945676
  %v1976 = vmul.f32 %v1958, %v1975
  %v1977 = vadd.f32 %v1976, 0.4994258
  %v1978 = vmul.f32 %v1958, %v1977
  %v1979 = vadd.f32 %v1978, 1.0
  %v1980 = vrcp.pop %v1979
  %v1981 = vmul.f32 %v1979, %v1980
  %v1982 = vsub.f32 1.0, %v1981
  %v1983 = vmul.f32 %v1980, %v1982
  %v1984 = vadd.f32 %v1980, %v1983
  %vm1985 = vweird.f32 %v1979
  %vm1986 = vweird.f32 %v1980
  %vm1987 = vmor %vm1985, %vm1986
  %v1988 = vsel %vm1987, %v1980, %v1984
  %v1989 = vand.u32 2147483647, %v1979
  %vm1990 = vcmp.eq.f32.partialorder %v1989, 8.507059e+37
  %v1991 = vand.u32 %v1979, 2147483648
  %v1992 = vor.u32 1.1754944e-38, %v1991
  %v1993 = vsel %vm1990, %v1992, %v1988
  %v1994 = vmul.f32 %v1969, %v1993
  %v1995 = vmin.f32 %v1994, 1.0
  %v1996 = vmax.f32 %v1995, -1.0
  %v1997 = vmul.f32 %v348, %v348
  %v1998 = vmin.f32 16.0, %v1997
  %v1999 = vmul.f32 %v1998, 2.1237322e-06
  %v2000 = vadd.f32 %v1999, 0.00028619796
  %v2001 = vmul.f32 %v1998, %v2000
  %v2002 = vadd.f32 %v2001, 0.0036580483
  %v2003 = vmul.f32 %v1998, %v2002
  %v2004 = vadd.f32 %v2003, 0.05243302
  %v2005 = vmul.f32 %v1998, %v2004
  %v2006 = vadd.f32 %v2005, 0.18741608
  %v2007 = vmul.f32 %v1998, %v2006
  %v2008 = vadd.f32 %v2007, 1.1283791
  %v2009 = vmul.f32 %v348, %v2008
  %v2010 = vmul.f32 %v1998, 3.8918573e-05
  %v2011 = vadd.f32 %v2010, 0.001143296
  %v2012 = vmul.f32 %v1998, %v2011
  %v2013 = vadd.f32 %v2012, 0.014752088
  %v2014 = vmul.f32 %v1998, %v2013
  %v2015 = vadd.f32 %v2014, 0.112945676
  %v2016 = vmul.f32 %v1998, %v2015
  %v2017 = vadd.f32 %v2016, 0.4994258
  %v2018 = vmul.f32 %v1998, %v2017
  %v2019 = vadd.f32 %v2018, 1.0
  %v2020 = vrcp.pop %v2019
  %v2021 = vmul.f32 %v2019, %v2020
  %v2022 = vsub.f32 1.0, %v2021
  %v2023 = vmul.f32 %v2020, %v2022
  %v2024 = vadd.f32 %v2020, %v2023
  %vm2025 = vweird.f32 %v2019
  %vm2026 = vweird.f32 %v2020
  %vm2027 = vmor %vm2025, %vm2026
  %v2028 = vsel %vm2027, %v2020, %v2024
  %v2029 = vand.u32 2147483647, %v2019
  %vm2030 = vcmp.eq.f32.partialorder %v2029, 8.507059e+37
  %v2031 = vand.u32 %v2019, 2147483648
  %v2032 = vor.u32 1.1754944e-38, %v2031
  %v2033 = vsel %vm2030, %v2032, %v2028
  %v2034 = vmul.f32 %v2009, %v2033
  %v2035 = vmin.f32 %v2034, 1.0
  %v2036 = vmax.f32 %v2035, -1.0
  %v2037 = vmul.f32 %v349, %v349
  %v2038 = vmin.f32 16.0, %v2037
  %v2039 = vmul.f32 %v2038, 2.1237322e-06
  %v2040 = vadd.f32 %v2039, 0.00028619796
  %v2041 = vmul.f32 %v2038, %v2040
  %v2042 = vadd.f32 %v2041, 0.0036580483
  %v2043 = vmul.f32 %v2038, %v2042
  %v2044 = vadd.f32 %v2043, 0.05243302
  %v2045 = vmul.f32 %v2038, %v2044
  %v2046 = vadd.f32 %v2045, 0.18741608
  %v2047 = vmul.f32 %v2038, %v2046
  %v2048 = vadd.f32 %v2047, 1.1283791
  %v2049 = vmul.f32 %v349, %v2048
  %v2050 = vmul.f32 %v2038, 3.8918573e-05
  %v2051 = vadd.f32 %v2050, 0.001143296
  %v2052 = vmul.f32 %v2038, %v2051
  %v2053 = vadd.f32 %v2052, 0.014752088
  %v2054 = vmul.f32 %v2038, %v2053
  %v2055 = vadd.f32 %v2054, 0.112945676
  %v2056 = vmul.f32 %v2038, %v2055
  %v2057 = vadd.f32 %v2056, 0.4994258
  %v2058 = vmul.f32 %v2038, %v2057
  %v2059 = vadd.f32 %v2058, 1.0
  %v2060 = vrcp.pop %v2059
  %v2061 = vmul.f32 %v2059, %v2060
  %v2062 = vsub.f32 1.0, %v2061
  %v2063 = vmul.f32 %v2060, %v2062
  %v2064 = vadd.f32 %v2060, %v2063
  %vm2065 = vweird.f32 %v2059
  %vm2066 = vweird.f32 %v2060
  %vm2067 = vmor %vm2065, %vm2066
  %v2068 = vsel %vm2067, %v2060, %v2064
  %v2069 = vand.u32 2147483647, %v2059
  %vm2070 = vcmp.eq.f32.partialorder %v2069, 8.507059e+37
  %v2071 = vand.u32 %v2059, 2147483648
  %v2072 = vor.u32 1.1754944e-38, %v2071
  %v2073 = vsel %vm2070, %v2072, %v2068
  %v2074 = vmul.f32 %v2049, %v2073
  %v2075 = vmin.f32 %v2074, 1.0
  %v2076 = vmax.f32 %v2075, -1.0
  %v2077 = vmul.f32 %v350, %v350
  %v2078 = vmin.f32 16.0, %v2077
  %v2079 = vmul.f32 %v2078, 2.1237322e-06
  %v2080 = vadd.f32 %v2079, 0.00028619796
  %v2081 = vmul.f32 %v2078, %v2080
  %v2082 = vadd.f32 %v2081, 0.0036580483
  %v2083 = vmul.f32 %v2078, %v2082
  %v2084 = vadd.f32 %v2083, 0.05243302
  %v2085 = vmul.f32 %v2078, %v2084
  %v2086 = vadd.f32 %v2085, 0.18741608
  %v2087 = vmul.f32 %v2078, %v2086
  %v2088 = vadd.f32 %v2087, 1.1283791
  %v2089 = vmul.f32 %v350, %v2088
  %v2090 = vmul.f32 %v2078, 3.8918573e-05
  %v2091 = vadd.f32 %v2090, 0.001143296
  %v2092 = vmul.f32 %v2078, %v2091
  %v2093 = vadd.f32 %v2092, 0.014752088
  %v2094 = vmul.f32 %v2078, %v2093
  %v2095 = vadd.f32 %v2094, 0.112945676
  %v2096 = vmul.f32 %v2078, %v2095
  %v2097 = vadd.f32 %v2096, 0.4994258
  %v2098 = vmul.f32 %v2078, %v2097
  %v2099 = vadd.f32 %v2098, 1.0
  %v2100 = vrcp.pop %v2099
  %v2101 = vmul.f32 %v2099, %v2100
  %v2102 = vsub.f32 1.0, %v2101
  %v2103 = vmul.f32 %v2100, %v2102
  %v2104 = vadd.f32 %v2100, %v2103
  %vm2105 = vweird.f32 %v2099
  %vm2106 = vweird.f32 %v2100
  %vm2107 = vmor %vm2105, %vm2106
  %v2108 = vsel %vm2107, %v2100, %v2104
  %v2109 = vand.u32 2147483647, %v2099
  %vm2110 = vcmp.eq.f32.partialorder %v2109, 8.507059e+37
  %v2111 = vand.u32 %v2099, 2147483648
  %v2112 = vor.u32 1.1754944e-38, %v2111
  %v2113 = vsel %vm2110, %v2112, %v2108
  %v2114 = vmul.f32 %v2089, %v2113
  %v2115 = vmin.f32 %v2114, 1.0
  %v2116 = vmax.f32 %v2115, -1.0
  %v2117 = vmul.f32 %v351, %v351
  %v2118 = vmin.f32 16.0, %v2117
  %v2119 = vmul.f32 %v2118, 2.1237322e-06
  %v2120 = vadd.f32 %v2119, 0.00028619796
  %v2121 = vmul.f32 %v2118, %v2120
  %v2122 = vadd.f32 %v2121, 0.0036580483
  %v2123 = vmul.f32 %v2118, %v2122
  %v2124 = vadd.f32 %v2123, 0.05243302
  %v2125 = vmul.f32 %v2118, %v2124
  %v2126 = vadd.f32 %v2125, 0.18741608
  %v2127 = vmul.f32 %v2118, %v2126
  %v2128 = vadd.f32 %v2127, 1.1283791
  %v2129 = vmul.f32 %v351, %v2128
  %v2130 = vmul.f32 %v2118, 3.8918573e-05
  %v2131 = vadd.f32 %v2130, 0.001143296
  %v2132 = vmul.f32 %v2118, %v2131
  %v2133 = vadd.f32 %v2132, 0.014752088
  %v2134 = vmul.f32 %v2118, %v2133
  %v2135 = vadd.f32 %v2134, 0.112945676
  %v2136 = vmul.f32 %v2118, %v2135
  %v2137 = vadd.f32 %v2136, 0.4994258
  %v2138 = vmul.f32 %v2118, %v2137
  %v2139 = vadd.f32 %v2138, 1.0
  %v2140 = vrcp.pop %v2139
  %v2141 = vmul.f32 %v2139, %v2140
  %v2142 = vsub.f32 1.0, %v2141
  %v2143 = vmul.f32 %v2140, %v2142
  %v2144 = vadd.f32 %v2140, %v2143
  %vm2145 = vweird.f32 %v2139
  %vm2146 = vweird.f32 %v2140
  %vm2147 = vmor %vm2145, %vm2146
  %v2148 = vsel %vm2147, %v2140, %v2144
  %v2149 = vand.u32 2147483647, %v2139
  %vm2150 = vcmp.eq.f32.partialorder %v2149, 8.507059e+37
  %v2151 = vand.u32 %v2139, 2147483648
  %v2152 = vor.u32 1.1754944e-38, %v2151
  %v2153 = vsel %vm2150, %v2152, %v2148
  %v2154 = vmul.f32 %v2129, %v2153
  %v2155 = vmin.f32 %v2154, 1.0
  %v2156 = vmax.f32 %v2155, -1.0
  %v2157 = vmul.f32 %v352, %v352
  %v2158 = vmin.f32 16.0, %v2157
  %v2159 = vmul.f32 %v2158, 2.1237322e-06
  %v2160 = vadd.f32 %v2159, 0.00028619796
  %v2161 = vmul.f32 %v2158, %v2160
  %v2162 = vadd.f32 %v2161, 0.0036580483
  %v2163 = vmul.f32 %v2158, %v2162
  %v2164 = vadd.f32 %v2163, 0.05243302
  %v2165 = vmul.f32 %v2158, %v2164
  %v2166 = vadd.f32 %v2165, 0.18741608
  %v2167 = vmul.f32 %v2158, %v2166
  %v2168 = vadd.f32 %v2167, 1.1283791
  %v2169 = vmul.f32 %v352, %v2168
  %v2170 = vmul.f32 %v2158, 3.8918573e-05
  %v2171 = vadd.f32 %v2170, 0.001143296
  %v2172 = vmul.f32 %v2158, %v2171
  %v2173 = vadd.f32 %v2172, 0.014752088
  %v2174 = vmul.f32 %v2158, %v2173
  %v2175 = vadd.f32 %v2174, 0.112945676
  %v2176 = vmul.f32 %v2158, %v2175
  %v2177 = vadd.f32 %v2176, 0.4994258
  %v2178 = vmul.f32 %v2158, %v2177
  %v2179 = vadd.f32 %v2178, 1.0
  %v2180 = vrcp.pop %v2179
  %v2181 = vmul.f32 %v2179, %v2180
  %v2182 = vsub.f32 1.0, %v2181
  %v2183 = vmul.f32 %v2180, %v2182
  %v2184 = vadd.f32 %v2180, %v2183
  %vm2185 = vweird.f32 %v2179
  %vm2186 = vweird.f32 %v2180
  %vm2187 = vmor %vm2185, %vm2186
  %v2188 = vsel %vm2187, %v2180, %v2184
  %v2189 = vand.u32 2147483647, %v2179
  %vm2190 = vcmp.eq.f32.partialorder %v2189, 8.507059e+37
  %v2191 = vand.u32 %v2179, 2147483648
  %v2192 = vor.u32 1.1754944e-38, %v2191
  %v2193 = vsel %vm2190, %v2192, %v2188
  %v2194 = vmul.f32 %v2169, %v2193
  %v2195 = vmin.f32 %v2194, 1.0
  %v2196 = vmax.f32 %v2195, -1.0
  %v2197 = vmul.f32 %v353, %v353
  %v2198 = vmin.f32 16.0, %v2197
  %v2199 = vmul.f32 %v2198, 2.1237322e-06
  %v2200 = vadd.f32 %v2199, 0.00028619796
  %v2201 = vmul.f32 %v2198, %v2200
  %v2202 = vadd.f32 %v2201, 0.0036580483
  %v2203 = vmul.f32 %v2198, %v2202
  %v2204 = vadd.f32 %v2203, 0.05243302
  %v2205 = vmul.f32 %v2198, %v2204
  %v2206 = vadd.f32 %v2205, 0.18741608
  %v2207 = vmul.f32 %v2198, %v2206
  %v2208 = vadd.f32 %v2207, 1.1283791
  %v2209 = vmul.f32 %v353, %v2208
  %v2210 = vmul.f32 %v2198, 3.8918573e-05
  %v2211 = vadd.f32 %v2210, 0.001143296
  %v2212 = vmul.f32 %v2198, %v2211
  %v2213 = vadd.f32 %v2212, 0.014752088
  %v2214 = vmul.f32 %v2198, %v2213
  %v2215 = vadd.f32 %v2214, 0.112945676
  %v2216 = vmul.f32 %v2198, %v2215
  %v2217 = vadd.f32 %v2216, 0.4994258
  %v2218 = vmul.f32 %v2198, %v2217
  %v2219 = vadd.f32 %v2218, 1.0
  %v2220 = vrcp.pop %v2219
  %v2221 = vmul.f32 %v2219, %v2220
  %v2222 = vsub.f32 1.0, %v2221
  %v2223 = vmul.f32 %v2220, %v2222
  %v2224 = vadd.f32 %v2220, %v2223
  %vm2225 = vweird.f32 %v2219
  %vm2226 = vweird.f32 %v2220
  %vm2227 = vmor %vm2225, %vm2226
  %v2228 = vsel %vm2227, %v2220, %v2224
  %v2229 = vand.u32 2147483647, %v2219
  %vm2230 = vcmp.eq.f32.partialorder %v2229, 8.507059e+37
  %v2231 = vand.u32 %v2219, 2147483648
  %v2232 = vor.u32 1.1754944e-38, %v2231
  %v2233 = vsel %vm2230, %v2232, %v2228
  %v2234 = vmul.f32 %v2209, %v2233
  %v2235 = vmin.f32 %v2234, 1.0
  %v2236 = vmax.f32 %v2235, -1.0
  %v2237 = vmul.f32 %v354, %v354
  %v2238 = vmin.f32 16.0, %v2237
  %v2239 = vmul.f32 %v2238, 2.1237322e-06
  %v2240 = vadd.f32 %v2239, 0.00028619796
  %v2241 = vmul.f32 %v2238, %v2240
  %v2242 = vadd.f32 %v2241, 0.0036580483
  %v2243 = vmul.f32 %v2238, %v2242
  %v2244 = vadd.f32 %v2243, 0.05243302
  %v2245 = vmul.f32 %v2238, %v2244
  %v2246 = vadd.f32 %v2245, 0.18741608
  %v2247 = vmul.f32 %v2238, %v2246
  %v2248 = vadd.f32 %v2247, 1.1283791
  %v2249 = vmul.f32 %v354, %v2248
  %v2250 = vmul.f32 %v2238, 3.8918573e-05
  %v2251 = vadd.f32 %v2250, 0.001143296
  %v2252 = vmul.f32 %v2238, %v2251
  %v2253 = vadd.f32 %v2252, 0.014752088
  %v2254 = vmul.f32 %v2238, %v2253
  %v2255 = vadd.f32 %v2254, 0.112945676
  %v2256 = vmul.f32 %v2238, %v2255
  %v2257 = vadd.f32 %v2256, 0.4994258
  %v2258 = vmul.f32 %v2238, %v2257
  %v2259 = vadd.f32 %v2258, 1.0
  %v2260 = vrcp.pop %v2259
  %v2261 = vmul.f32 %v2259, %v2260
  %v2262 = vsub.f32 1.0, %v2261
  %v2263 = vmul.f32 %v2260, %v2262
  %v2264 = vadd.f32 %v2260, %v2263
  %vm2265 = vweird.f32 %v2259
  %vm2266 = vweird.f32 %v2260
  %vm2267 = vmor %vm2265, %vm2266
  %v2268 = vsel %vm2267, %v2260, %v2264
  %v2269 = vand.u32 2147483647, %v2259
  %vm2270 = vcmp.eq.f32.partialorder %v2269, 8.507059e+37
  %v2271 = vand.u32 %v2259, 2147483648
  %v2272 = vor.u32 1.1754944e-38, %v2271
  %v2273 = vsel %vm2270, %v2272, %v2268
  %v2274 = vmul.f32 %v2249, %v2273
  %v2275 = vmin.f32 %v2274, 1.0
  %v2276 = vmax.f32 %v2275, -1.0
  %v2277 = vmul.f32 %v355, %v355
  %v2278 = vmin.f32 16.0, %v2277
  %v2279 = vmul.f32 %v2278, 2.1237322e-06
  %v2280 = vadd.f32 %v2279, 0.00028619796
  %v2281 = vmul.f32 %v2278, %v2280
  %v2282 = vadd.f32 %v2281, 0.0036580483
  %v2283 = vmul.f32 %v2278, %v2282
  %v2284 = vadd.f32 %v2283, 0.05243302
  %v2285 = vmul.f32 %v2278, %v2284
  %v2286 = vadd.f32 %v2285, 0.18741608
  %v2287 = vmul.f32 %v2278, %v2286
  %v2288 = vadd.f32 %v2287, 1.1283791
  %v2289 = vmul.f32 %v355, %v2288
  %v2290 = vmul.f32 %v2278, 3.8918573e-05
  %v2291 = vadd.f32 %v2290, 0.001143296
  %v2292 = vmul.f32 %v2278, %v2291
  %v2293 = vadd.f32 %v2292, 0.014752088
  %v2294 = vmul.f32 %v2278, %v2293
  %v2295 = vadd.f32 %v2294, 0.112945676
  %v2296 = vmul.f32 %v2278, %v2295
  %v2297 = vadd.f32 %v2296, 0.4994258
  %v2298 = vmul.f32 %v2278, %v2297
  %v2299 = vadd.f32 %v2298, 1.0
  %v2300 = vrcp.pop %v2299
  %v2301 = vmul.f32 %v2299, %v2300
  %v2302 = vsub.f32 1.0, %v2301
  %v2303 = vmul.f32 %v2300, %v2302
  %v2304 = vadd.f32 %v2300, %v2303
  %vm2305 = vweird.f32 %v2299
  %vm2306 = vweird.f32 %v2300
  %vm2307 = vmor %vm2305, %vm2306
  %v2308 = vsel %vm2307, %v2300, %v2304
  %v2309 = vand.u32 2147483647, %v2299
  %vm2310 = vcmp.eq.f32.partialorder %v2309, 8.507059e+37
  %v2311 = vand.u32 %v2299, 2147483648
  %v2312 = vor.u32 1.1754944e-38, %v2311
  %v2313 = vsel %vm2310, %v2312, %v2308
  %v2314 = vmul.f32 %v2289, %v2313
  %v2315 = vmin.f32 %v2314, 1.0
  %v2316 = vmax.f32 %v2315, -1.0
  %v2317 = vmul.f32 %v356, %v356
  %v2318 = vmin.f32 16.0, %v2317
  %v2319 = vmul.f32 %v2318, 2.1237322e-06
  %v2320 = vadd.f32 %v2319, 0.00028619796
  %v2321 = vmul.f32 %v2318, %v2320
  %v2322 = vadd.f32 %v2321, 0.0036580483
  %v2323 = vmul.f32 %v2318, %v2322
  %v2324 = vadd.f32 %v2323, 0.05243302
  %v2325 = vmul.f32 %v2318, %v2324
  %v2326 = vadd.f32 %v2325, 0.18741608
  %v2327 = vmul.f32 %v2318, %v2326
  %v2328 = vadd.f32 %v2327, 1.1283791
  %v2329 = vmul.f32 %v356, %v2328
  %v2330 = vmul.f32 %v2318, 3.8918573e-05
  %v2331 = vadd.f32 %v2330, 0.001143296
  %v2332 = vmul.f32 %v2318, %v2331
  %v2333 = vadd.f32 %v2332, 0.014752088
  %v2334 = vmul.f32 %v2318, %v2333
  %v2335 = vadd.f32 %v2334, 0.112945676
  %v2336 = vmul.f32 %v2318, %v2335
  %v2337 = vadd.f32 %v2336, 0.4994258
  %v2338 = vmul.f32 %v2318, %v2337
  %v2339 = vadd.f32 %v2338, 1.0
  %v2340 = vrcp.pop %v2339
  %v2341 = vmul.f32 %v2339, %v2340
  %v2342 = vsub.f32 1.0, %v2341
  %v2343 = vmul.f32 %v2340, %v2342
  %v2344 = vadd.f32 %v2340, %v2343
  %vm2345 = vweird.f32 %v2339
  %vm2346 = vweird.f32 %v2340
  %vm2347 = vmor %vm2345, %vm2346
  %v2348 = vsel %vm2347, %v2340, %v2344
  %v2349 = vand.u32 2147483647, %v2339
  %vm2350 = vcmp.eq.f32.partialorder %v2349, 8.507059e+37
  %v2351 = vand.u32 %v2339, 2147483648
  %v2352 = vor.u32 1.1754944e-38, %v2351
  %v2353 = vsel %vm2350, %v2352, %v2348
  %v2354 = vmul.f32 %v2329, %v2353
  %v2355 = vmin.f32 %v2354, 1.0
  %v2356 = vmax.f32 %v2355, -1.0
  %v2357 = vadd.f32 %v396, 1.0
  %v2358 = vadd.f32 %v436, 1.0
  %v2359 = vadd.f32 %v476, 1.0
  %v2360 = vadd.f32 %v516, 1.0
  %v2361 = vadd.f32 %v556, 1.0
  %v2362 = vadd.f32 %v596, 1.0
  %v2363 = vadd.f32 %v636, 1.0
  %v2364 = vadd.f32 %v676, 1.0
  %v2365 = vadd.f32 %v716, 1.0
  %v2366 = vadd.f32 %v756, 1.0
  %v2367 = vadd.f32 %v796, 1.0
  %v2368 = vadd.f32 %v836, 1.0
  %v2369 = vadd.f32 %v876, 1.0
  %v2370 = vadd.f32 %v916, 1.0
  %v2371 = vadd.f32 %v956, 1.0
  %v2372 = vadd.f32 %v996, 1.0
  %v2373 = vadd.f32 %v1036, 1.0
  %v2374 = vadd.f32 %v1076, 1.0
  %v2375 = vadd.f32 %v1116, 1.0
  %v2376 = vadd.f32 %v1156, 1.0
  %v2377 = vadd.f32 %v1196, 1.0
  %v2378 = vadd.f32 %v1236, 1.0
  %v2379 = vadd.f32 %v1276, 1.0
  %v2380 = vadd.f32 %v1316, 1.0
  %v2381 = vadd.f32 %v1356, 1.0
  %v2382 = vadd.f32 %v1396, 1.0
  %v2383 = vadd.f32 %v1436, 1.0
  %v2384 = vadd.f32 %v1476, 1.0
  %v2385 = vadd.f32 %v1516, 1.0
  %v2386 = vadd.f32 %v1556, 1.0
  %v2387 = vadd.f32 %v1596, 1.0
  %v2388 = vadd.f32 %v1636, 1.0
  %v2389 = vadd.f32 %v1676, 1.0
  %v2390 = vadd.f32 %v1716, 1.0
  %v2391 = vadd.f32 %v1756, 1.0
  %v2392 = vadd.f32 %v1796, 1.0
  %v2393 = vadd.f32 %v1836, 1.0
  %v2394 = vadd.f32 %v1876, 1.0
  %v2395 = vadd.f32 %v1916, 1.0
  %v2396 = vadd.f32 %v1956, 1.0
  %v2397 = vadd.f32 %v1996, 1.0
  %v2398 = vadd.f32 %v2036, 1.0
  %v2399 = vadd.f32 %v2076, 1.0
  %v2400 = vadd.f32 %v2116, 1.0
  %v2401 = vadd.f32 %v2156, 1.0
  %v2402 = vadd.f32 %v2196, 1.0
  %v2403 = vadd.f32 %v2236, 1.0
  %v2404 = vadd.f32 %v2276, 1.0
  %v2405 = vadd.f32 %v2316, 1.0
  %v2406 = vadd.f32 %v2356, 1.0
  %v2407 = vmul.f32 %v257, %v2357
  %v2408 = vmul.f32 %v258, %v2358
  %v2409 = vmul.f32 %v259, %v2359
  %v2410 = vmul.f32 %v260, %v2360
  %v2411 = vmul.f32 %v261, %v2361
  %v2412 = vmul.f32 %v262, %v2362
  %v2413 = vmul.f32 %v263, %v2363
  %v2414 = vmul.f32 %v264, %v2364
  %v2415 = vmul.f32 %v265, %v2365
  %v2416 = vmul.f32 %v266, %v2366
  %v2417 = vmul.f32 %v267, %v2367
  %v2418 = vmul.f32 %v268, %v2368
  %v2419 = vmul.f32 %v269, %v2369
  %v2420 = vmul.f32 %v270, %v2370
  %v2421 = vmul.f32 %v271, %v2371
  %v2422 = vmul.f32 %v272, %v2372
  %v2423 = vmul.f32 %v273, %v2373
  %v2424 = vmul.f32 %v274, %v2374
  %v2425 = vmul.f32 %v275, %v2375
  %v2426 = vmul.f32 %v276, %v2376
  %v2427 = vmul.f32 %v277, %v2377
  %v2428 = vmul.f32 %v278, %v2378
  %v2429 = vmul.f32 %v279, %v2379
  %v2430 = vmul.f32 %v280, %v2380
  %v2431 = vmul.f32 %v281, %v2381
  %v2432 = vmul.f32 %v282, %v2382
  %v2433 = vmul.f32 %v283, %v2383
  %v2434 = vmul.f32 %v284, %v2384
  %v2435 = vmul.f32 %v285, %v2385
  %v2436 = vmul.f32 %v286, %v2386
  %v2437 = vmul.f32 %v287, %v2387
  %v2438 = vmul.f32 %v288, %v2388
  %v2439 = vmul.f32 %v289, %v2389
  %v2440 = vmul.f32 %v290, %v2390
  %v2441 = vmul.f32 %v291, %v2391
  %v2442 = vmul.f32 %v292, %v2392
  %v2443 = vmul.f32 %v293, %v2393
  %v2444 = vmul.f32 %v294, %v2394
  %v2445 = vmul.f32 %v295, %v2395
  %v2446 = vmul.f32 %v296, %v2396
  %v2447 = vmul.f32 %v297, %v2397
  %v2448 = vmul.f32 %v298, %v2398
  %v2449 = vmul.f32 %v299, %v2399
  %v2450 = vmul.f32 %v300, %v2400
  %v2451 = vmul.f32 %v301, %v2401
  %v2452 = vmul.f32 %v302, %v2402
  %v2453 = vmul.f32 %v303, %v2403
  %v2454 = vmul.f32 %v304, %v2404
  %v2455 = vmul.f32 %v305, %v2405
  %v2456 = vmul.f32 %v306, %v2406
  %v2457 = vld [vmem:[%s3] sm:$0xff]
  %v2458 = vld [vmem:[%s3 + $0x8] sm:$0xff]
  %v2459 = vld [vmem:[%s3 + $0x10] sm:$0xff]
  %v2460 = vld [vmem:[%s3 + $0x18] sm:$0xff]
  %v2461 = vld [vmem:[%s3 + $0x20] sm:$0xff]
  %v2462 = vld [vmem:[%s3 + $0x28] sm:$0xff]
  %v2463 = vld [vmem:[%s3 + $0x30] sm:$0xff]
  %v2464 = vld [vmem:[%s3 + $0x38] sm:$0xff]
  %v2465 = vld [vmem:[%s3 + $0x40] sm:$0xff]
  %v2466 = vld [vmem:[%s3 + $0x48] sm:$0xff]
  %v2467 = vld [vmem:[%s3 + $0x50] sm:$0xff]
  %v2468 = vld [vmem:[%s3 + $0x58] sm:$0xff]
  %v2469 = vld [vmem:[%s3 + $0x60] sm:$0xff]
  %v2470 = vld [vmem:[%s3 + $0x68] sm:$0xff]
  %v2471 = vld [vmem:[%s3 + $0x70] sm:$0xff]
  %v2472 = vld [vmem:[%s3 + $0x78] sm:$0xff]
  %v2473 = vld [vmem:[%s4] sm:$0x1]
  %v2475 = vperm.slane %v2473, 0
  %2477 = vmatpush.msra.mxu0 %v2472
  %2478 = vmatpush.msra.mxu0 %v2471
  %2479 = vmatpush.msra.mxu0 %v2470
  %2480 = vmatpush.msra.mxu0 %v2469
  %2481 = vmatpush.msra.mxu0 %v2468
  %2482 = vmatpush.msra.mxu0 %v2467
  %2483 = vmatpush.msra.mxu0 %v2466
  %2484 = vmatpush.msra.mxu0 %v2465
  %2485 = vmatpush.msra.mxu0 %v2464
  %2486 = vmatpush.msra.mxu0 %v2463
  %2487 = vmatpush.msra.mxu0 %v2462
  %2488 = vmatpush.msra.mxu0 %v2461
  %2489 = vmatpush.msra.mxu0 %v2460
  %2490 = vmatpush.msra.mxu0 %v2459
  %2491 = vmatpush.msra.mxu0 %v2458
  %2492 = vmatpush.msra.mxu0 %v2457
  %2493 = vmatmul.f32.gmra.mxu0 %v2407
  %v2494 = vpop.f32.mrf.mxu0
  %v2495 = vadd.f32 %v2475, %v2494
  %2496 = vmatmul.f32.gmra.mxu0 %v2408
  %v2497 = vpop.f32.mrf.mxu0
  %v2498 = vadd.f32 %v2475, %v2497
  %2499 = vmatmul.f32.gmra.mxu0 %v2409
  %v2500 = vpop.f32.mrf.mxu0
  %v2501 = vadd.f32 %v2475, %v2500
  %2502 = vmatmul.f32.gmra.mxu0 %v2410
  %v2503 = vpop.f32.mrf.mxu0
  %v2504 = vadd.f32 %v2475, %v2503
  %2505 = vmatmul.f32.gmra.mxu0 %v2411
  %v2506 = vpop.f32.mrf.mxu0
  %v2507 = vadd.f32 %v2475, %v2506
  %2508 = vmatmul.f32.gmra.mxu0 %v2412
  %v2509 = vpop.f32.mrf.mxu0
  %v2510 = vadd.f32 %v2475, %v2509
  %2511 = vmatmul.f32.gmra.mxu0 %v2413
  %v2512 = vpop.f32.mrf.mxu0
  %v2513 = vadd.f32 %v2475, %v2512
  %2514 = vmatmul.f32.gmra.mxu0 %v2414
  %v2515 = vpop.f32.mrf.mxu0
  %v2516 = vadd.f32 %v2475, %v2515
  %2517 = vmatmul.f32.gmra.mxu0 %v2415
  %v2518 = vpop.f32.mrf.mxu0
  %v2519 = vadd.f32 %v2475, %v2518
  %2520 = vmatmul.f32.gmra.mxu0 %v2416
  %v2521 = vpop.f32.mrf.mxu0
  %v2522 = vadd.f32 %v2475, %v2521
  %2523 = vmatmul.f32.gmra.mxu0 %v2417
  %v2524 = vpop.f32.mrf.mxu0
  %v2525 = vadd.f32 %v2475, %v2524
  %2526 = vmatmul.f32.gmra.mxu0 %v2418
  %v2527 = vpop.f32.mrf.mxu0
  %v2528 = vadd.f32 %v2475, %v2527
  %2529 = vmatmul.f32.gmra.mxu0 %v2419
  %v2530 = vpop.f32.mrf.mxu0
  %v2531 = vadd.f32 %v2475, %v2530
  %2532 = vmatmul.f32.gmra.mxu0 %v2420
  %v2533 = vpop.f32.mrf.mxu0
  %v2534 = vadd.f32 %v2475, %v2533
  %2535 = vmatmul.f32.gmra.mxu0 %v2421
  %v2536 = vpop.f32.mrf.mxu0
  %v2537 = vadd.f32 %v2475, %v2536
  %2538 = vmatmul.f32.gmra.mxu0 %v2422
  %v2539 = vpop.f32.mrf.mxu0
  %v2540 = vadd.f32 %v2475, %v2539
  %2541 = vmatmul.f32.gmra.mxu0 %v2423
  %v2542 = vpop.f32.mrf.mxu0
  %v2543 = vadd.f32 %v2475, %v2542
  %2544 = vmatmul.f32.gmra.mxu0 %v2424
  %v2545 = vpop.f32.mrf.mxu0
  %v2546 = vadd.f32 %v2475, %v2545
  %2547 = vmatmul.f32.gmra.mxu0 %v2425
  %v2548 = vpop.f32.mrf.mxu0
  %v2549 = vadd.f32 %v2475, %v2548
  %2550 = vmatmul.f32.gmra.mxu0 %v2426
  %v2551 = vpop.f32.mrf.mxu0
  %v2552 = vadd.f32 %v2475, %v2551
  %2553 = vmatmul.f32.gmra.mxu0 %v2427
  %v2554 = vpop.f32.mrf.mxu0
  %v2555 = vadd.f32 %v2475, %v2554
  %2556 = vmatmul.f32.gmra.mxu0 %v2428
  %v2557 = vpop.f32.mrf.mxu0
  %v2558 = vadd.f32 %v2475, %v2557
  %2559 = vmatmul.f32.gmra.mxu0 %v2429
  %v2560 = vpop.f32.mrf.mxu0
  %v2561 = vadd.f32 %v2475, %v2560
  %2562 = vmatmul.f32.gmra.mxu0 %v2430
  %v2563 = vpop.f32.mrf.mxu0
  %v2564 = vadd.f32 %v2475, %v2563
  %2565 = vmatmul.f32.gmra.mxu0 %v2431
  %v2566 = vpop.f32.mrf.mxu0
  %v2567 = vadd.f32 %v2475, %v2566
  %2568 = vmatmul.f32.gmra.mxu0 %v2432
  %v2569 = vpop.f32.mrf.mxu0
  %v2570 = vadd.f32 %v2475, %v2569
  %2571 = vmatmul.f32.gmra.mxu0 %v2433
  %v2572 = vpop.f32.mrf.mxu0
  %v2573 = vadd.f32 %v2475, %v2572
  %2574 = vmatmul.f32.gmra.mxu0 %v2434
  %v2575 = vpop.f32.mrf.mxu0
  %v2576 = vadd.f32 %v2475, %v2575
  %2577 = vmatmul.f32.gmra.mxu0 %v2435
  %v2578 = vpop.f32.mrf.mxu0
  %v2579 = vadd.f32 %v2475, %v2578
  %2580 = vmatmul.f32.gmra.mxu0 %v2436
  %v2581 = vpop.f32.mrf.mxu0
  %v2582 = vadd.f32 %v2475, %v2581
  %2583 = vmatmul.f32.gmra.mxu0 %v2437
  %v2584 = vpop.f32.mrf.mxu0
  %v2585 = vadd.f32 %v2475, %v2584
  %2586 = vmatmul.f32.gmra.mxu0 %v2438
  %v2587 = vpop.f32.mrf.mxu0
  %v2588 = vadd.f32 %v2475, %v2587
  %2589 = vmatmul.f32.gmra.mxu0 %v2439
  %v2590 = vpop.f32.mrf.mxu0
  %v2591 = vadd.f32 %v2475, %v2590
  %2592 = vmatmul.f32.gmra.mxu0 %v2440
  %v2593 = vpop.f32.mrf.mxu0
  %v2594 = vadd.f32 %v2475, %v2593
  %2595 = vmatmul.f32.gmra.mxu0 %v2441
  %v2596 = vpop.f32.mrf.mxu0
  %v2597 = vadd.f32 %v2475, %v2596
  %2598 = vmatmul.f32.gmra.mxu0 %v2442
  %v2599 = vpop.f32.mrf.mxu0
  %v2600 = vadd.f32 %v2475, %v2599
  %2601 = vmatmul.f32.gmra.mxu0 %v2443
  %v2602 = vpop.f32.mrf.mxu0
  %v2603 = vadd.f32 %v2475, %v2602
  %2604 = vmatmul.f32.gmra.mxu0 %v2444
  %v2605 = vpop.f32.mrf.mxu0
  %v2606 = vadd.f32 %v2475, %v2605
  %2607 = vmatmul.f32.gmra.mxu0 %v2445
  %v2608 = vpop.f32.mrf.mxu0
  %v2609 = vadd.f32 %v2475, %v2608
  %2610 = vmatmul.f32.gmra.mxu0 %v2446
  %v2611 = vpop.f32.mrf.mxu0
  %v2612 = vadd.f32 %v2475, %v2611
  %2613 = vmatmul.f32.gmra.mxu0 %v2447
  %v2614 = vpop.f32.mrf.mxu0
  %v2615 = vadd.f32 %v2475, %v2614
  %2616 = vmatmul.f32.gmra.mxu0 %v2448
  %v2617 = vpop.f32.mrf.mxu0
  %v2618 = vadd.f32 %v2475, %v2617
  %2619 = vmatmul.f32.gmra.mxu0 %v2449
  %v2620 = vpop.f32.mrf.mxu0
  %v2621 = vadd.f32 %v2475, %v2620
  %2622 = vmatmul.f32.gmra.mxu0 %v2450
  %v2623 = vpop.f32.mrf.mxu0
  %v2624 = vadd.f32 %v2475, %v2623
  %2625 = vmatmul.f32.gmra.mxu0 %v2451
  %v2626 = vpop.f32.mrf.mxu0
  %v2627 = vadd.f32 %v2475, %v2626
  %2628 = vmatmul.f32.gmra.mxu0 %v2452
  %v2629 = vpop.f32.mrf.mxu0
  %v2630 = vadd.f32 %v2475, %v2629
  %2631 = vmatmul.f32.gmra.mxu0 %v2453
  %v2632 = vpop.f32.mrf.mxu0
  %v2633 = vadd.f32 %v2475, %v2632
  %2634 = vmatmul.f32.gmra.mxu0 %v2454
  %v2635 = vpop.f32.mrf.mxu0
  %v2636 = vadd.f32 %v2475, %v2635
  %2637 = vmatmul.f32.gmra.mxu0 %v2455
  %v2638 = vpop.f32.mrf.mxu0
  %v2639 = vadd.f32 %v2475, %v2638
  %2640 = vmatmul.f32.gmra.mxu0 %v2456
  %v2641 = vpop.f32.mrf.mxu0
  %v2642 = vadd.f32 %v2475, %v2641
  %2643 = vdwg.mxu0
  %2644 = vst [vmem:[%s5] sm:$0xff] %v2495
  %2645 = vst [vmem:[%s5 + $0x8] sm:$0xff] %v2498
  %2646 = vst [vmem:[%s5 + $0x10] sm:$0xff] %v2501
  %2647 = vst [vmem:[%s5 + $0x18] sm:$0xff] %v2504
  %2648 = vst [vmem:[%s5 + $0x20] sm:$0xff] %v2507
  %2649 = vst [vmem:[%s5 + $0x28] sm:$0xff] %v2510
  %2650 = vst [vmem:[%s5 + $0x30] sm:$0xff] %v2513
  %2651 = vst [vmem:[%s5 + $0x38] sm:$0xff] %v2516
  %2652 = vst [vmem:[%s5 + $0x40] sm:$0xff] %v2519
  %2653 = vst [vmem:[%s5 + $0x48] sm:$0xff] %v2522
  %2654 = vst [vmem:[%s5 + $0x50] sm:$0xff] %v2525
  %2655 = vst [vmem:[%s5 + $0x58] sm:$0xff] %v2528
  %2656 = vst [vmem:[%s5 + $0x60] sm:$0xff] %v2531
  %2657 = vst [vmem:[%s5 + $0x68] sm:$0xff] %v2534
  %2658 = vst [vmem:[%s5 + $0x70] sm:$0xff] %v2537
  %2659 = vst [vmem:[%s5 + $0x78] sm:$0xff] %v2540
  %2660 = vst [vmem:[%s5 + $0x80] sm:$0xff] %v2543
  %2661 = vst [vmem:[%s5 + $0x88] sm:$0xff] %v2546
  %2662 = vst [vmem:[%s5 + $0x90] sm:$0xff] %v2549
  %2663 = vst [vmem:[%s5 + $0x98] sm:$0xff] %v2552
  %2664 = vst [vmem:[%s5 + $0xa0] sm:$0xff] %v2555
  %2665 = vst [vmem:[%s5 + $0xa8] sm:$0xff] %v2558
  %2666 = vst [vmem:[%s5 + $0xb0] sm:$0xff] %v2561
  %2667 = vst [vmem:[%s5 + $0xb8] sm:$0xff] %v2564
  %2668 = vst [vmem:[%s5 + $0xc0] sm:$0xff] %v2567
  %2669 = vst [vmem:[%s5 + $0xc8] sm:$0xff] %v2570
  %2670 = vst [vmem:[%s5 + $0xd0] sm:$0xff] %v2573
  %2671 = vst [vmem:[%s5 + $0xd8] sm:$0xff] %v2576
  %2672 = vst [vmem:[%s5 + $0xe0] sm:$0xff] %v2579
  %2673 = vst [vmem:[%s5 + $0xe8] sm:$0xff] %v2582
  %2674 = vst [vmem:[%s5 + $0xf0] sm:$0xff] %v2585
  %2675 = vst [vmem:[%s5 + $0xf8] sm:$0xff] %v2588
  %2676 = vst [vmem:[%s5 + $0x100] sm:$0xff] %v2591
  %2677 = vst [vmem:[%s5 + $0x108] sm:$0xff] %v2594
  %2678 = vst [vmem:[%s5 + $0x110] sm:$0xff] %v2597
  %2679 = vst [vmem:[%s5 + $0x118] sm:$0xff] %v2600
  %2680 = vst [vmem:[%s5 + $0x120] sm:$0xff] %v2603
  %2681 = vst [vmem:[%s5 + $0x128] sm:$0xff] %v2606
  %2682 = vst [vmem:[%s5 + $0x130] sm:$0xff] %v2609
  %2683 = vst [vmem:[%s5 + $0x138] sm:$0xff] %v2612
  %2684 = vst [vmem:[%s5 + $0x140] sm:$0xff] %v2615
  %2685 = vst [vmem:[%s5 + $0x148] sm:$0xff] %v2618
  %2686 = vst [vmem:[%s5 + $0x150] sm:$0xff] %v2621
  %2687 = vst [vmem:[%s5 + $0x158] sm:$0xff] %v2624
  %2688 = vst [vmem:[%s5 + $0x160] sm:$0xff] %v2627
  %2689 = vst [vmem:[%s5 + $0x168] sm:$0xff] %v2630
  %2690 = vst [vmem:[%s5 + $0x170] sm:$0xff] %v2633
  %2691 = vst [vmem:[%s5 + $0x178] sm:$0xff] %v2636
  %2692 = vst [vmem:[%s5 + $0x180] sm:$0xff] %v2639
  %2693 = vst [vmem:[%s5 + $0x188] sm:$0xff] %v2642
  // Predicated region
  $region22: #{_mlp_forward_impl.1} parent=0 // pred_check
    _
  $region23: #{_mlp_forward_impl.1} parent=0 // pred_check_branch
    %2695 = sbr.rel (0) target = $region25
  $region24: #{_mlp_forward_impl.1} parent=0 // pred_region
    _
  $region25: #{_mlp_forward_impl.1} parent=0 // pred_fallthru
    _
  // Predicated region
  $region26: #{_mlp_forward_impl.1} parent=0 // pred_check
    _
  $region27: #{_mlp_forward_impl.1} parent=0 // pred_check_branch
    %2697 = sbr.rel (0) target = $region29
  $region28: #{_mlp_forward_impl.1} parent=0 // pred_region
    _
  $region29: #{_mlp_forward_impl.1} parent=0 // pred_fallthru
    _

</llo_original>
